<compile_context>
chip_gen: v5e
topology: v5e:2x2
jax: 0.10.0
libtpu: 0.0.40
codegen_flags: <defaults>
</compile_context>

<pallas_src>
import functools

import jax
import jax.numpy as jnp
from jax.experimental import pallas as pl
from jax.experimental.pallas import tpu as pltpu


def _hybrid_kernel(x_ref,
                   we1_ref, be1_ref, we2_ref, be2_ref,      # encoder
                   wc1_ref, bc1_ref, wc2_ref, bc2_ref,      # dynamics correction MLP
                   wd1_ref, bd1_ref, wd2_ref, bd2_ref,      # decoder
                   out_ref,
                   *, k, dt, g, l):
    f32 = jnp.float32
    dt = float(dt)
    g_l_dt = float(g / l) * dt                 # folded scalar constant

    hid = wc1_ref.shape[0]
    tb = x_ref.shape[1]                        # batch tile size (lane axis)

    x = x_ref[...].astype(f32)                 # (obs, TB), lane-dense over the batch

    # ---- encoder: obs -> hid -> 3; TB is the lane-dense MXU N dimension ----
    h = jnp.maximum(
        jnp.dot(we1_ref[...], x, preferred_element_type=f32) + be1_ref[...], 0.0)
    z = jnp.dot(we2_ref[...], h, preferred_element_type=f32) + be2_ref[...]   # (3, TB)

    # Latent state as three lane-dense (1, TB) rows; never re-concatenated in the loop.
    c = z[0:1, :]                              # ~ cos(theta) * r
    s = z[1:2, :]                              # ~ sin(theta) * r
    td = z[2:3, :]                             # theta_dot

    # Hoist loop-invariant lane-broadcasts (weight columns, biases) out of the k loop.
    wc1 = wc1_ref[...]                         # (hid, 3)
    wc1_c = jnp.broadcast_to(wc1[:, 0:1], (hid, tb))
    wc1_s = jnp.broadcast_to(wc1[:, 1:2], (hid, tb))
    wc1_t = jnp.broadcast_to(wc1[:, 2:3], (hid, tb))
    bc1_b = jnp.broadcast_to(bc1_ref[...], (hid, tb))
    bc2_b = jnp.broadcast_to(bc2_ref[...], (3, tb))
    wc2 = wc2_ref[...]                         # (3, hid)

    def step(c, s, td):
        # cos/sin of atan2(s, c), guarded so (0, 0) matches arctan2(0, 0) = 0 -> (1, 0).
        r2 = c * c + s * s
        safe = r2 > 0.0
        inv_r = jax.lax.rsqrt(jnp.where(safe, r2, 1.0))       # EUP rsqrt
        c0 = jnp.where(safe, c * inv_r, 1.0)
        s0 = jnp.where(safe, s * inv_r, 0.0)

        # symplectic (semi-implicit) Euler pendulum step
        td_new = td - g_l_dt * s0
        dth = td_new * dt
        cd = jnp.cos(dth)                                     # EUP
        sd = jnp.sin(dth)                                     # EUP
        c_new = c0 * cd - s0 * sd                             # cos(theta + dth)
        s_new = s0 * cd + c0 * sd                             # sin(theta + dth)

        # correction L1: width-3 contraction as VPU broadcast-FMAs over (hid, TB);
        # the only per-step broadcast is the cheap sublane-broadcast of the (1, TB) state.
        hc = jnp.maximum(c_new * wc1_c + s_new * wc1_s + td_new * wc1_t + bc1_b, 0.0)
        # correction L2 on the MXU, lane-dense over TB: (3, hid) @ (hid, TB).
        corr = jnp.dot(wc2, hc, preferred_element_type=f32) + bc2_b      # (3, TB)

        return (c_new + corr[0:1, :],
                s_new + corr[1:2, :],
                td_new + corr[2:3, :])

    if k <= 16:
        for _ in range(k):                     # small k: fully unrolled
            c, s, td = step(c, s, td)
    else:                                      # large k: bounded instruction stream
        c, s, td = jax.lax.fori_loop(0, k, lambda _, zz: step(*zz), (c, s, td),
                                     unroll=4)

    # ---- decoder: 3 -> hid (VPU FMAs) -> obs (MXU, lane-dense over TB) ----
    wd1 = wd1_ref[...]                         # (hid, 3)
    hd = jnp.maximum(c * wd1[:, 0:1] + s * wd1[:, 1:2] + td * wd1[:, 2:3]
                     + bd1_ref[...], 0.0)      # (hid, TB)
    out_ref[...] = (jnp.dot(wd2_ref[...], hd, preferred_element_type=f32)
                    + bd2_ref[...]).astype(out_ref.dtype)     # unmasked lane-dense store


def hybrid_forward(x, params, *, k=1, dt=0.1, g=1.0, l=1.0, batch_tile=None):
    """x: (B, observable_dim) float32 -> (B, observable_dim) float32.

    Params use the torch nn.Linear layout: weight (out_features, in_features),
    bias (out_features, 1).  The kernel runs in a (feature, batch) layout so the
    batch is on the lane axis; the transposes here are cheap XLA layout plumbing.
    """
    B, obs = x.shape

    if batch_tile is None:
        if B <= 128:
            # Single full-batch tile (block == full array dims, so no (8,128) issue).
            # Can't split below 128 lanes without violating the lane-tiling rule, so
            # megacore sharding only kicks in for B >= 256.
            TB = B
        else:
            # 128-aligned lane tiles; >= 2 grid steps so both TensorCores are used on
            # 2-TC chips (v7x); cap at 1024 to amortize ~0.35us/step on v5e/v6e.
            TB = min(1024, ((pl.cdiv(B, 2) + 127) // 128) * 128)
    else:
        TB = int(batch_tile)

    grid = (pl.cdiv(B, TB),)

    xT = x.T                                                   # (obs, B) feature-major

    x_spec = pl.BlockSpec((obs, TB), lambda i: (0, i))
    out_spec = pl.BlockSpec((obs, TB), lambda i: (0, i))

    # Constant index_map keeps every weight/bias resident in VMEM across grid steps.
    def resident(p):
        return pl.BlockSpec(p.shape, lambda i: (0, 0))

    in_specs = [x_spec] + [resident(p) for p in params]

    kernel = functools.partial(_hybrid_kernel, k=int(k), dt=float(dt),
                               g=float(g), l=float(l))
    outT = pl.pallas_call(
        kernel,
        out_shape=jax.ShapeDtypeStruct((obs, B), jnp.float32),
        grid=grid,
        in_specs=in_specs,
        out_specs=out_spec,
        compiler_params=pltpu.CompilerParams(
            dimension_semantics=("parallel",)),    # megacore sharding on v7x
    )(xT, *params)
    return outT.T


def make_params(key, observable_dim=12, hidden_dim=30, latent_dim=3):
    """Deterministic init in torch nn.Linear layout: weight (out, in), bias (out, 1)."""
    ks = jax.random.split(key, 6)

    def lin(k_, fan_in, fan_out):
        scale = 1.0 / jnp.sqrt(jnp.float32(fan_in))
        w = jax.random.uniform(k_, (fan_out, fan_in), jnp.float32, -scale, scale)
        b = jax.random.uniform(jax.random.fold_in(k_, 1), (fan_out, 1), jnp.float32,
                               -scale, scale)
        return w, b

    we1, be1 = lin(ks[0], observable_dim, hidden_dim)   # encoder L1
    we2, be2 = lin(ks[1], hidden_dim, latent_dim)       # encoder L2
    wc1, bc1 = lin(ks[2], latent_dim, hidden_dim)       # correction L1
    wc2, bc2 = lin(ks[3], hidden_dim, latent_dim)       # correction L2
    wd1, bd1 = lin(ks[4], latent_dim, hidden_dim)       # decoder L1
    wd2, bd2 = lin(ks[5], hidden_dim, observable_dim)   # decoder L2
    return (we1, be1, we2, be2, wc1, bc1, wc2, bc2, wd1, bd1, wd2, bd2)


def hybrid_reference(x, params, *, k=1, dt=0.1, g=1.0, l=1.0):
    """Pure-JAX reference (uses arctan2 exactly like the torch code)."""
    (we1, be1, we2, be2, wc1, bc1, wc2, bc2, wd1, bd1, wd2, bd2) = params

    def lin(v, w, b):
        return v @ w.T + b.T

    h = jnp.maximum(lin(x, we1, be1), 0.0)
    z = lin(h, we2, be2)
    for _ in range(k):
        theta = jnp.arctan2(z[:, 1], z[:, 0])
        td = z[:, 2]
        td = td - (g / l) * jnp.sin(theta) * dt
        theta = theta + td * dt
        z = jnp.stack([jnp.cos(theta), jnp.sin(theta), td], axis=1)
        hc = jnp.maximum(lin(z, wc1, bc1), 0.0)
        z = z + lin(hc, wc2, bc2)
    hd = jnp.maximum(lin(z, wd1, bd1), 0.0)
    return lin(hd, wd2, bd2)


if __name__ == "__main__":
    OBS, HID = 12, 30
    K, DT, G, L = 3, 0.1, 1.0, 1.0

    key = jax.random.PRNGKey(0)
    kx, kx2, kp = jax.random.split(key, 3)
    params = make_params(kp, observable_dim=OBS, hidden_dim=HID, latent_dim=3)

    # Small single-tile case (B=8, block == full array dims).
    x = jax.random.normal(kx, (8, OBS), jnp.float32)
    out = jax.block_until_ready(hybrid_forward(x, params, k=K, dt=DT, g=G, l=L))
    ref = hybrid_reference(x, params, k=K, dt=DT, g=G, l=L)
    assert out.shape == (8, OBS)
    assert jnp.max(jnp.abs(out - ref)) < 1e-3, "mismatch vs pure-JAX reference (B=8)"

    # Multi-tile grid (grid=(2,), TB=128) to exercise the lane-tiled batch pipeline
    # (and megacore sharding on 2-TC chips).
    x2 = jax.random.normal(kx2, (256, OBS), jnp.float32)
    out2 = jax.block_until_ready(
        hybrid_forward(x2, params, k=K, dt=DT, g=G, l=L, batch_tile=128))
    ref2 = hybrid_reference(x2, params, k=K, dt=DT, g=G, l=L)
    assert out2.shape == (256, OBS)
    assert jnp.max(jnp.abs(out2 - ref2)) < 1e-3, "mismatch vs pure-JAX reference (B=256)"

    print("KERNEL_OK")
</pallas_src>

<mosaic_0001>
module attributes {stable_mosaic.version = 11 : i64} {
  func.func @_hybrid_kernel(%arg0: i32, %arg1: memref<12x8xf32, #tpu.memory_space<vmem>>, %arg2: memref<30x12xf32, #tpu.memory_space<vmem>>, %arg3: memref<30x1xf32, #tpu.memory_space<vmem>>, %arg4: memref<3x30xf32, #tpu.memory_space<vmem>>, %arg5: memref<3x1xf32, #tpu.memory_space<vmem>>, %arg6: memref<30x3xf32, #tpu.memory_space<vmem>>, %arg7: memref<30x1xf32, #tpu.memory_space<vmem>>, %arg8: memref<3x30xf32, #tpu.memory_space<vmem>>, %arg9: memref<3x1xf32, #tpu.memory_space<vmem>>, %arg10: memref<30x3xf32, #tpu.memory_space<vmem>>, %arg11: memref<30x1xf32, #tpu.memory_space<vmem>>, %arg12: memref<12x30xf32, #tpu.memory_space<vmem>>, %arg13: memref<12x1xf32, #tpu.memory_space<vmem>>, %arg14: memref<12x8xf32, #tpu.memory_space<vmem>>) attributes {dimension_semantics = [#tpu.dimension_semantics<parallel>], iteration_bounds = array<i64: 1>, scalar_prefetch = 0 : i64, scratch_operands = 0 : i64, tpu.core_type = #tpu.core_type<tc>, window_params = [{transform_indices = @transform_0, window_bounds = array<i64: 12, 8>}, {pipeline_mode = #tpu.pipeline_mode<synchronous>, transform_indices = @transform_1, window_bounds = array<i64: 30, 12>}, {pipeline_mode = #tpu.pipeline_mode<synchronous>, transform_indices = @transform_2, window_bounds = array<i64: 30, 1>}, {pipeline_mode = #tpu.pipeline_mode<synchronous>, transform_indices = @transform_3, window_bounds = array<i64: 3, 30>}, {pipeline_mode = #tpu.pipeline_mode<synchronous>, transform_indices = @transform_4, window_bounds = array<i64: 3, 1>}, {pipeline_mode = #tpu.pipeline_mode<synchronous>, transform_indices = @transform_5, window_bounds = array<i64: 30, 3>}, {pipeline_mode = #tpu.pipeline_mode<synchronous>, transform_indices = @transform_6, window_bounds = array<i64: 30, 1>}, {pipeline_mode = #tpu.pipeline_mode<synchronous>, transform_indices = @transform_7, window_bounds = array<i64: 3, 30>}, {pipeline_mode = #tpu.pipeline_mode<synchronous>, transform_indices = @transform_8, window_bounds = array<i64: 3, 1>}, {pipeline_mode = #tpu.pipeline_mode<synchronous>, transform_indices = @transform_9, window_bounds = array<i64: 30, 3>}, {pipeline_mode = #tpu.pipeline_mode<synchronous>, transform_indices = @transform_10, window_bounds = array<i64: 30, 1>}, {pipeline_mode = #tpu.pipeline_mode<synchronous>, transform_indices = @transform_11, window_bounds = array<i64: 12, 30>}, {pipeline_mode = #tpu.pipeline_mode<synchronous>, transform_indices = @transform_12, window_bounds = array<i64: 12, 1>}, {transform_indices = @transform_13, window_bounds = array<i64: 12, 8>}]} {
    %c0 = arith.constant 0 : index
    %c0_0 = arith.constant 0 : index
    %0 = vector.load %arg1[%c0, %c0_0] : memref<12x8xf32, #tpu.memory_space<vmem>>, vector<12x8xf32>
    %c0_1 = arith.constant 0 : index
    %c0_2 = arith.constant 0 : index
    %1 = vector.load %arg2[%c0_1, %c0_2] : memref<30x12xf32, #tpu.memory_space<vmem>>, vector<30x12xf32>
    %cst = arith.constant dense<0.000000e+00> : vector<30x8xf32>
    %2 = tpu.matmul %1, %0, %cst {dimension_numbers = #tpu.dot_dimension_numbers<[1], [0], [0], [1], [0, 0, 1, 1], [], []>} : vector<30x12xf32>, vector<12x8xf32>, vector<30x8xf32> -> vector<30x8xf32>
    %c0_3 = arith.constant 0 : index
    %c0_4 = arith.constant 0 : index
    %3 = vector.load %arg3[%c0_3, %c0_4] : memref<30x1xf32, #tpu.memory_space<vmem>>, vector<30x1xf32>
    %4 = vector.broadcast %3 : vector<30x1xf32> to vector<30x8xf32>
    %5 = arith.addf %2, %4 : vector<30x8xf32>
    %cst_5 = arith.constant 0.000000e+00 : f32
    %6 = vector.broadcast %cst_5 : f32 to vector<30x8xf32>
    %7 = arith.maximumf %5, %6 : vector<30x8xf32>
    %c0_6 = arith.constant 0 : index
    %c0_7 = arith.constant 0 : index
    %8 = vector.load %arg4[%c0_6, %c0_7] : memref<3x30xf32, #tpu.memory_space<vmem>>, vector<3x30xf32>
    %cst_8 = arith.constant dense<0.000000e+00> : vector<3x8xf32>
    %9 = tpu.matmul %8, %7, %cst_8 {dimension_numbers = #tpu.dot_dimension_numbers<[1], [0], [0], [1], [0, 0, 1, 1], [], []>} : vector<3x30xf32>, vector<30x8xf32>, vector<3x8xf32> -> vector<3x8xf32>
    %c0_9 = arith.constant 0 : index
    %c0_10 = arith.constant 0 : index
    %10 = vector.load %arg5[%c0_9, %c0_10] : memref<3x1xf32, #tpu.memory_space<vmem>>, vector<3x1xf32>
    %11 = vector.broadcast %10 : vector<3x1xf32> to vector<3x8xf32>
    %12 = arith.addf %9, %11 : vector<3x8xf32>
    %13 = vector.extract_strided_slice %12 {offsets = [0, 0], sizes = [1, 8], strides = [1, 1]} : vector<3x8xf32> to vector<1x8xf32>
    %14 = vector.extract_strided_slice %12 {offsets = [1, 0], sizes = [1, 8], strides = [1, 1]} : vector<3x8xf32> to vector<1x8xf32>
    %15 = vector.extract_strided_slice %12 {offsets = [2, 0], sizes = [1, 8], strides = [1, 1]} : vector<3x8xf32> to vector<1x8xf32>
    %c0_11 = arith.constant 0 : index
    %c0_12 = arith.constant 0 : index
    %16 = vector.load %arg6[%c0_11, %c0_12] : memref<30x3xf32, #tpu.memory_space<vmem>>, vector<30x3xf32>
    %17 = vector.extract_strided_slice %16 {offsets = [0, 0], sizes = [30, 1], strides = [1, 1]} : vector<30x3xf32> to vector<30x1xf32>
    %18 = vector.shape_cast %17 : vector<30x1xf32> to vector<30x1xf32>
    %19 = vector.broadcast %18 : vector<30x1xf32> to vector<30x8xf32>
    %20 = vector.extract_strided_slice %16 {offsets = [0, 1], sizes = [30, 1], strides = [1, 1]} : vector<30x3xf32> to vector<30x1xf32>
    %21 = vector.shape_cast %20 : vector<30x1xf32> to vector<30x1xf32>
    %22 = vector.broadcast %21 : vector<30x1xf32> to vector<30x8xf32>
    %23 = vector.extract_strided_slice %16 {offsets = [0, 2], sizes = [30, 1], strides = [1, 1]} : vector<30x3xf32> to vector<30x1xf32>
    %24 = vector.shape_cast %23 : vector<30x1xf32> to vector<30x1xf32>
    %25 = vector.broadcast %24 : vector<30x1xf32> to vector<30x8xf32>
    %c0_13 = arith.constant 0 : index
    %c0_14 = arith.constant 0 : index
    %26 = vector.load %arg7[%c0_13, %c0_14] : memref<30x1xf32, #tpu.memory_space<vmem>>, vector<30x1xf32>
    %27 = vector.shape_cast %26 : vector<30x1xf32> to vector<30x1xf32>
    %28 = vector.broadcast %27 : vector<30x1xf32> to vector<30x8xf32>
    %c0_15 = arith.constant 0 : index
    %c0_16 = arith.constant 0 : index
    %29 = vector.load %arg9[%c0_15, %c0_16] : memref<3x1xf32, #tpu.memory_space<vmem>>, vector<3x1xf32>
    %30 = vector.shape_cast %29 : vector<3x1xf32> to vector<3x1xf32>
    %31 = vector.broadcast %30 : vector<3x1xf32> to vector<3x8xf32>
    %c0_17 = arith.constant 0 : index
    %c0_18 = arith.constant 0 : index
    %32 = vector.load %arg8[%c0_17, %c0_18] : memref<3x30xf32, #tpu.memory_space<vmem>>, vector<3x30xf32>
    %33 = arith.mulf %13, %13 : vector<1x8xf32>
    %34 = arith.mulf %14, %14 : vector<1x8xf32>
    %35 = arith.addf %33, %34 : vector<1x8xf32>
    %cst_19 = arith.constant 0.000000e+00 : f32
    %36 = vector.broadcast %cst_19 : f32 to vector<1x8xf32>
    %37 = arith.cmpf ogt, %35, %36 : vector<1x8xf32>
    %cst_20 = arith.constant 1.000000e+00 : f32
    %38 = vector.broadcast %cst_20 : f32 to vector<1x8xf32>
    %39 = arith.select %37, %35, %38 : vector<1x8xi1>, vector<1x8xf32>
    %40 = math.rsqrt %39 : vector<1x8xf32>
    %41 = arith.mulf %13, %40 : vector<1x8xf32>
    %cst_21 = arith.constant 1.000000e+00 : f32
    %42 = vector.broadcast %cst_21 : f32 to vector<1x8xf32>
    %43 = arith.select %37, %41, %42 : vector<1x8xi1>, vector<1x8xf32>
    %44 = arith.mulf %14, %40 : vector<1x8xf32>
    %cst_22 = arith.constant 0.000000e+00 : f32
    %45 = vector.broadcast %cst_22 : f32 to vector<1x8xf32>
    %46 = arith.select %37, %44, %45 : vector<1x8xi1>, vector<1x8xf32>
    %cst_23 = arith.constant 1.000000e-01 : f32
    %47 = vector.broadcast %cst_23 : f32 to vector<1x8xf32>
    %48 = arith.mulf %47, %46 : vector<1x8xf32>
    %49 = arith.subf %15, %48 : vector<1x8xf32>
    %cst_24 = arith.constant 1.000000e-01 : f32
    %50 = vector.broadcast %cst_24 : f32 to vector<1x8xf32>
    %51 = arith.mulf %49, %50 : vector<1x8xf32>
    %52 = math.cos %51 : vector<1x8xf32>
    %53 = math.sin %51 : vector<1x8xf32>
    %54 = arith.mulf %43, %52 : vector<1x8xf32>
    %55 = arith.mulf %46, %53 : vector<1x8xf32>
    %56 = arith.subf %54, %55 : vector<1x8xf32>
    %57 = arith.mulf %46, %52 : vector<1x8xf32>
    %58 = arith.mulf %43, %53 : vector<1x8xf32>
    %59 = arith.addf %57, %58 : vector<1x8xf32>
    %60 = vector.broadcast %56 : vector<1x8xf32> to vector<30x8xf32>
    %61 = arith.mulf %60, %19 : vector<30x8xf32>
    %62 = vector.broadcast %59 : vector<1x8xf32> to vector<30x8xf32>
    %63 = arith.mulf %62, %22 : vector<30x8xf32>
    %64 = arith.addf %61, %63 : vector<30x8xf32>
    %65 = vector.broadcast %49 : vector<1x8xf32> to vector<30x8xf32>
    %66 = arith.mulf %65, %25 : vector<30x8xf32>
    %67 = arith.addf %64, %66 : vector<30x8xf32>
    %68 = arith.addf %67, %28 : vector<30x8xf32>
    %cst_25 = arith.constant 0.000000e+00 : f32
    %69 = vector.broadcast %cst_25 : f32 to vector<30x8xf32>
    %70 = arith.maximumf %68, %69 : vector<30x8xf32>
    %cst_26 = arith.constant dense<0.000000e+00> : vector<3x8xf32>
    %71 = tpu.matmul %32, %70, %cst_26 {dimension_numbers = #tpu.dot_dimension_numbers<[1], [0], [0], [1], [0, 0, 1, 1], [], []>} : vector<3x30xf32>, vector<30x8xf32>, vector<3x8xf32> -> vector<3x8xf32>
    %72 = arith.addf %71, %31 : vector<3x8xf32>
    %73 = vector.extract_strided_slice %72 {offsets = [0, 0], sizes = [1, 8], strides = [1, 1]} : vector<3x8xf32> to vector<1x8xf32>
    %74 = arith.addf %56, %73 : vector<1x8xf32>
    %75 = vector.extract_strided_slice %72 {offsets = [1, 0], sizes = [1, 8], strides = [1, 1]} : vector<3x8xf32> to vector<1x8xf32>
    %76 = arith.addf %59, %75 : vector<1x8xf32>
    %77 = vector.extract_strided_slice %72 {offsets = [2, 0], sizes = [1, 8], strides = [1, 1]} : vector<3x8xf32> to vector<1x8xf32>
    %78 = arith.addf %49, %77 : vector<1x8xf32>
    %79 = arith.mulf %74, %74 : vector<1x8xf32>
    %80 = arith.mulf %76, %76 : vector<1x8xf32>
    %81 = arith.addf %79, %80 : vector<1x8xf32>
    %cst_27 = arith.constant 0.000000e+00 : f32
    %82 = vector.broadcast %cst_27 : f32 to vector<1x8xf32>
    %83 = arith.cmpf ogt, %81, %82 : vector<1x8xf32>
    %cst_28 = arith.constant 1.000000e+00 : f32
    %84 = vector.broadcast %cst_28 : f32 to vector<1x8xf32>
    %85 = arith.select %83, %81, %84 : vector<1x8xi1>, vector<1x8xf32>
    %86 = math.rsqrt %85 : vector<1x8xf32>
    %87 = arith.mulf %74, %86 : vector<1x8xf32>
    %cst_29 = arith.constant 1.000000e+00 : f32
    %88 = vector.broadcast %cst_29 : f32 to vector<1x8xf32>
    %89 = arith.select %83, %87, %88 : vector<1x8xi1>, vector<1x8xf32>
    %90 = arith.mulf %76, %86 : vector<1x8xf32>
    %cst_30 = arith.constant 0.000000e+00 : f32
    %91 = vector.broadcast %cst_30 : f32 to vector<1x8xf32>
    %92 = arith.select %83, %90, %91 : vector<1x8xi1>, vector<1x8xf32>
    %cst_31 = arith.constant 1.000000e-01 : f32
    %93 = vector.broadcast %cst_31 : f32 to vector<1x8xf32>
    %94 = arith.mulf %93, %92 : vector<1x8xf32>
    %95 = arith.subf %78, %94 : vector<1x8xf32>
    %cst_32 = arith.constant 1.000000e-01 : f32
    %96 = vector.broadcast %cst_32 : f32 to vector<1x8xf32>
    %97 = arith.mulf %95, %96 : vector<1x8xf32>
    %98 = math.cos %97 : vector<1x8xf32>
    %99 = math.sin %97 : vector<1x8xf32>
    %100 = arith.mulf %89, %98 : vector<1x8xf32>
    %101 = arith.mulf %92, %99 : vector<1x8xf32>
    %102 = arith.subf %100, %101 : vector<1x8xf32>
    %103 = arith.mulf %92, %98 : vector<1x8xf32>
    %104 = arith.mulf %89, %99 : vector<1x8xf32>
    %105 = arith.addf %103, %104 : vector<1x8xf32>
    %106 = vector.broadcast %102 : vector<1x8xf32> to vector<30x8xf32>
    %107 = arith.mulf %106, %19 : vector<30x8xf32>
    %108 = vector.broadcast %105 : vector<1x8xf32> to vector<30x8xf32>
    %109 = arith.mulf %108, %22 : vector<30x8xf32>
    %110 = arith.addf %107, %109 : vector<30x8xf32>
    %111 = vector.broadcast %95 : vector<1x8xf32> to vector<30x8xf32>
    %112 = arith.mulf %111, %25 : vector<30x8xf32>
    %113 = arith.addf %110, %112 : vector<30x8xf32>
    %114 = arith.addf %113, %28 : vector<30x8xf32>
    %cst_33 = arith.constant 0.000000e+00 : f32
    %115 = vector.broadcast %cst_33 : f32 to vector<30x8xf32>
    %116 = arith.maximumf %114, %115 : vector<30x8xf32>
    %cst_34 = arith.constant dense<0.000000e+00> : vector<3x8xf32>
    %117 = tpu.matmul %32, %116, %cst_34 {dimension_numbers = #tpu.dot_dimension_numbers<[1], [0], [0], [1], [0, 0, 1, 1], [], []>} : vector<3x30xf32>, vector<30x8xf32>, vector<3x8xf32> -> vector<3x8xf32>
    %118 = arith.addf %117, %31 : vector<3x8xf32>
    %119 = vector.extract_strided_slice %118 {offsets = [0, 0], sizes = [1, 8], strides = [1, 1]} : vector<3x8xf32> to vector<1x8xf32>
    %120 = arith.addf %102, %119 : vector<1x8xf32>
    %121 = vector.extract_strided_slice %118 {offsets = [1, 0], sizes = [1, 8], strides = [1, 1]} : vector<3x8xf32> to vector<1x8xf32>
    %122 = arith.addf %105, %121 : vector<1x8xf32>
    %123 = vector.extract_strided_slice %118 {offsets = [2, 0], sizes = [1, 8], strides = [1, 1]} : vector<3x8xf32> to vector<1x8xf32>
    %124 = arith.addf %95, %123 : vector<1x8xf32>
    %125 = arith.mulf %120, %120 : vector<1x8xf32>
    %126 = arith.mulf %122, %122 : vector<1x8xf32>
    %127 = arith.addf %125, %126 : vector<1x8xf32>
    %cst_35 = arith.constant 0.000000e+00 : f32
    %128 = vector.broadcast %cst_35 : f32 to vector<1x8xf32>
    %129 = arith.cmpf ogt, %127, %128 : vector<1x8xf32>
    %cst_36 = arith.constant 1.000000e+00 : f32
    %130 = vector.broadcast %cst_36 : f32 to vector<1x8xf32>
    %131 = arith.select %129, %127, %130 : vector<1x8xi1>, vector<1x8xf32>
    %132 = math.rsqrt %131 : vector<1x8xf32>
    %133 = arith.mulf %120, %132 : vector<1x8xf32>
    %cst_37 = arith.constant 1.000000e+00 : f32
    %134 = vector.broadcast %cst_37 : f32 to vector<1x8xf32>
    %135 = arith.select %129, %133, %134 : vector<1x8xi1>, vector<1x8xf32>
    %136 = arith.mulf %122, %132 : vector<1x8xf32>
    %cst_38 = arith.constant 0.000000e+00 : f32
    %137 = vector.broadcast %cst_38 : f32 to vector<1x8xf32>
    %138 = arith.select %129, %136, %137 : vector<1x8xi1>, vector<1x8xf32>
    %cst_39 = arith.constant 1.000000e-01 : f32
    %139 = vector.broadcast %cst_39 : f32 to vector<1x8xf32>
    %140 = arith.mulf %139, %138 : vector<1x8xf32>
    %141 = arith.subf %124, %140 : vector<1x8xf32>
    %cst_40 = arith.constant 1.000000e-01 : f32
    %142 = vector.broadcast %cst_40 : f32 to vector<1x8xf32>
    %143 = arith.mulf %141, %142 : vector<1x8xf32>
    %144 = math.cos %143 : vector<1x8xf32>
    %145 = math.sin %143 : vector<1x8xf32>
    %146 = arith.mulf %135, %144 : vector<1x8xf32>
    %147 = arith.mulf %138, %145 : vector<1x8xf32>
    %148 = arith.subf %146, %147 : vector<1x8xf32>
    %149 = arith.mulf %138, %144 : vector<1x8xf32>
    %150 = arith.mulf %135, %145 : vector<1x8xf32>
    %151 = arith.addf %149, %150 : vector<1x8xf32>
    %152 = vector.broadcast %148 : vector<1x8xf32> to vector<30x8xf32>
    %153 = arith.mulf %152, %19 : vector<30x8xf32>
    %154 = vector.broadcast %151 : vector<1x8xf32> to vector<30x8xf32>
    %155 = arith.mulf %154, %22 : vector<30x8xf32>
    %156 = arith.addf %153, %155 : vector<30x8xf32>
    %157 = vector.broadcast %141 : vector<1x8xf32> to vector<30x8xf32>
    %158 = arith.mulf %157, %25 : vector<30x8xf32>
    %159 = arith.addf %156, %158 : vector<30x8xf32>
    %160 = arith.addf %159, %28 : vector<30x8xf32>
    %cst_41 = arith.constant 0.000000e+00 : f32
    %161 = vector.broadcast %cst_41 : f32 to vector<30x8xf32>
    %162 = arith.maximumf %160, %161 : vector<30x8xf32>
    %cst_42 = arith.constant dense<0.000000e+00> : vector<3x8xf32>
    %163 = tpu.matmul %32, %162, %cst_42 {dimension_numbers = #tpu.dot_dimension_numbers<[1], [0], [0], [1], [0, 0, 1, 1], [], []>} : vector<3x30xf32>, vector<30x8xf32>, vector<3x8xf32> -> vector<3x8xf32>
    %164 = arith.addf %163, %31 : vector<3x8xf32>
    %165 = vector.extract_strided_slice %164 {offsets = [0, 0], sizes = [1, 8], strides = [1, 1]} : vector<3x8xf32> to vector<1x8xf32>
    %166 = arith.addf %148, %165 : vector<1x8xf32>
    %167 = vector.extract_strided_slice %164 {offsets = [1, 0], sizes = [1, 8], strides = [1, 1]} : vector<3x8xf32> to vector<1x8xf32>
    %168 = arith.addf %151, %167 : vector<1x8xf32>
    %169 = vector.extract_strided_slice %164 {offsets = [2, 0], sizes = [1, 8], strides = [1, 1]} : vector<3x8xf32> to vector<1x8xf32>
    %170 = arith.addf %141, %169 : vector<1x8xf32>
    %c0_43 = arith.constant 0 : index
    %c0_44 = arith.constant 0 : index
    %171 = vector.load %arg10[%c0_43, %c0_44] : memref<30x3xf32, #tpu.memory_space<vmem>>, vector<30x3xf32>
    %172 = vector.extract_strided_slice %171 {offsets = [0, 0], sizes = [30, 1], strides = [1, 1]} : vector<30x3xf32> to vector<30x1xf32>
    %173 = vector.broadcast %166 : vector<1x8xf32> to vector<30x8xf32>
    %174 = vector.broadcast %172 : vector<30x1xf32> to vector<30x8xf32>
    %175 = arith.mulf %173, %174 : vector<30x8xf32>
    %176 = vector.extract_strided_slice %171 {offsets = [0, 1], sizes = [30, 1], strides = [1, 1]} : vector<30x3xf32> to vector<30x1xf32>
    %177 = vector.broadcast %168 : vector<1x8xf32> to vector<30x8xf32>
    %178 = vector.broadcast %176 : vector<30x1xf32> to vector<30x8xf32>
    %179 = arith.mulf %177, %178 : vector<30x8xf32>
    %180 = arith.addf %175, %179 : vector<30x8xf32>
    %181 = vector.extract_strided_slice %171 {offsets = [0, 2], sizes = [30, 1], strides = [1, 1]} : vector<30x3xf32> to vector<30x1xf32>
    %182 = vector.broadcast %170 : vector<1x8xf32> to vector<30x8xf32>
    %183 = vector.broadcast %181 : vector<30x1xf32> to vector<30x8xf32>
    %184 = arith.mulf %182, %183 : vector<30x8xf32>
    %185 = arith.addf %180, %184 : vector<30x8xf32>
    %c0_45 = arith.constant 0 : index
    %c0_46 = arith.constant 0 : index
    %186 = vector.load %arg11[%c0_45, %c0_46] : memref<30x1xf32, #tpu.memory_space<vmem>>, vector<30x1xf32>
    %187 = vector.broadcast %186 : vector<30x1xf32> to vector<30x8xf32>
    %188 = arith.addf %185, %187 : vector<30x8xf32>
    %cst_47 = arith.constant 0.000000e+00 : f32
    %189 = vector.broadcast %cst_47 : f32 to vector<30x8xf32>
    %190 = arith.maximumf %188, %189 : vector<30x8xf32>
    %c0_48 = arith.constant 0 : index
    %c0_49 = arith.constant 0 : index
    %191 = vector.load %arg12[%c0_48, %c0_49] : memref<12x30xf32, #tpu.memory_space<vmem>>, vector<12x30xf32>
    %cst_50 = arith.constant dense<0.000000e+00> : vector<12x8xf32>
    %192 = tpu.matmul %191, %190, %cst_50 {dimension_numbers = #tpu.dot_dimension_numbers<[1], [0], [0], [1], [0, 0, 1, 1], [], []>} : vector<12x30xf32>, vector<30x8xf32>, vector<12x8xf32> -> vector<12x8xf32>
    %c0_51 = arith.constant 0 : index
    %c0_52 = arith.constant 0 : index
    %193 = vector.load %arg13[%c0_51, %c0_52] : memref<12x1xf32, #tpu.memory_space<vmem>>, vector<12x1xf32>
    %194 = vector.broadcast %193 : vector<12x1xf32> to vector<12x8xf32>
    %195 = arith.addf %192, %194 : vector<12x8xf32>
    %c0_53 = arith.constant 0 : index
    %c0_54 = arith.constant 0 : index
    %196 = vector.load %arg14[%c0_53, %c0_54] : memref<12x8xf32, #tpu.memory_space<vmem>>, vector<12x8xf32>
    tpu.vector_store %arg14[%c0_53, %c0_54], %195 {strides = array<i32>} : memref<12x8xf32, #tpu.memory_space<vmem>>, vector<12x8xf32>,
    return
  }
  func.func @transform_0(%arg0: i32) -> (i32, i32) {
    %c0_i32 = arith.constant 0 : i32
    %c0_i32_0 = arith.constant 0 : i32
    return %c0_i32, %arg0 : i32, i32
  }
  func.func @transform_1(%arg0: i32) -> (i32, i32) {
    %c0_i32 = arith.constant 0 : i32
    %c0_i32_0 = arith.constant 0 : i32
    %c0_i32_1 = arith.constant 0 : i32
    return %c0_i32, %c0_i32_0 : i32, i32
  }
  func.func @transform_2(%arg0: i32) -> (i32, i32) {
    %c0_i32 = arith.constant 0 : i32
    %c0_i32_0 = arith.constant 0 : i32
    %c0_i32_1 = arith.constant 0 : i32
    return %c0_i32, %c0_i32_0 : i32, i32
  }
  func.func @transform_3(%arg0: i32) -> (i32, i32) {
    %c0_i32 = arith.constant 0 : i32
    %c0_i32_0 = arith.constant 0 : i32
    %c0_i32_1 = arith.constant 0 : i32
    return %c0_i32, %c0_i32_0 : i32, i32
  }
  func.func @transform_4(%arg0: i32) -> (i32, i32) {
    %c0_i32 = arith.constant 0 : i32
    %c0_i32_0 = arith.constant 0 : i32
    %c0_i32_1 = arith.constant 0 : i32
    return %c0_i32, %c0_i32_0 : i32, i32
  }
  func.func @transform_5(%arg0: i32) -> (i32, i32) {
    %c0_i32 = arith.constant 0 : i32
    %c0_i32_0 = arith.constant 0 : i32
    %c0_i32_1 = arith.constant 0 : i32
    return %c0_i32, %c0_i32_0 : i32, i32
  }
  func.func @transform_6(%arg0: i32) -> (i32, i32) {
    %c0_i32 = arith.constant 0 : i32
    %c0_i32_0 = arith.constant 0 : i32
    %c0_i32_1 = arith.constant 0 : i32
    return %c0_i32, %c0_i32_0 : i32, i32
  }
  func.func @transform_7(%arg0: i32) -> (i32, i32) {
    %c0_i32 = arith.constant 0 : i32
    %c0_i32_0 = arith.constant 0 : i32
    %c0_i32_1 = arith.constant 0 : i32
    return %c0_i32, %c0_i32_0 : i32, i32
  }
  func.func @transform_8(%arg0: i32) -> (i32, i32) {
    %c0_i32 = arith.constant 0 : i32
    %c0_i32_0 = arith.constant 0 : i32
    %c0_i32_1 = arith.constant 0 : i32
    return %c0_i32, %c0_i32_0 : i32, i32
  }
  func.func @transform_9(%arg0: i32) -> (i32, i32) {
    %c0_i32 = arith.constant 0 : i32
    %c0_i32_0 = arith.constant 0 : i32
    %c0_i32_1 = arith.constant 0 : i32
    return %c0_i32, %c0_i32_0 : i32, i32
  }
  func.func @transform_10(%arg0: i32) -> (i32, i32) {
    %c0_i32 = arith.constant 0 : i32
    %c0_i32_0 = arith.constant 0 : i32
    %c0_i32_1 = arith.constant 0 : i32
    return %c0_i32, %c0_i32_0 : i32, i32
  }
  func.func @transform_11(%arg0: i32) -> (i32, i32) {
    %c0_i32 = arith.constant 0 : i32
    %c0_i32_0 = arith.constant 0 : i32
    %c0_i32_1 = arith.constant 0 : i32
    return %c0_i32, %c0_i32_0 : i32, i32
  }
  func.func @transform_12(%arg0: i32) -> (i32, i32) {
    %c0_i32 = arith.constant 0 : i32
    %c0_i32_0 = arith.constant 0 : i32
    %c0_i32_1 = arith.constant 0 : i32
    return %c0_i32, %c0_i32_0 : i32, i32
  }
  func.func @transform_13(%arg0: i32) -> (i32, i32) {
    %c0_i32 = arith.constant 0 : i32
    %c0_i32_0 = arith.constant 0 : i32
    return %c0_i32, %arg0 : i32, i32
  }
}

</mosaic_0001>

<llo_original>
// kernel: tpu_custom_call.1
$region0: #{tpu_custom_call.1}
  #allocation0 [shape = 'u32[]', space=smem, size = 0x4, offset = 0x4, fixed_abs, tag = 'smem constant byte address 0x4 - core index']
  #allocation1 [shape = 'u32[72,128]{1,0:T(1,128)}', space=vmem, size = 0x9000, scoped, tag = 'internal scratch']
  %s0 = inlined_call_operand.vmem [shape: f32[12,8], index: 0, kind: input, shape index: {}]
  %s1 = inlined_call_operand.vmem [shape: f32[30,12], index: 1, kind: input, shape index: {}]
  %s2 = inlined_call_operand.vmem [shape: f32[30,1], index: 2, kind: input, shape index: {}]
  %s3 = inlined_call_operand.vmem [shape: f32[3,30], index: 3, kind: input, shape index: {}]
  %s4 = inlined_call_operand.vmem [shape: f32[3,1], index: 4, kind: input, shape index: {}]
  %s5 = inlined_call_operand.vmem [shape: f32[30,3], index: 5, kind: input, shape index: {}]
  %s6 = inlined_call_operand.vmem [shape: f32[30,1], index: 6, kind: input, shape index: {}]
  %s7 = inlined_call_operand.vmem [shape: f32[3,30], index: 7, kind: input, shape index: {}]
  %s8 = inlined_call_operand.vmem [shape: f32[3,1], index: 8, kind: input, shape index: {}]
  %s9 = inlined_call_operand.vmem [shape: f32[30,3], index: 9, kind: input, shape index: {}]
  %s10 = inlined_call_operand.vmem [shape: f32[30,1], index: 10, kind: input, shape index: {}]
  %s11 = inlined_call_operand.vmem [shape: f32[12,30], index: 11, kind: input, shape index: {}]
  %s12 = inlined_call_operand.vmem [shape: f32[12,1], index: 12, kind: input, shape index: {}]
  %s13 = inlined_call_operand.vmem [shape: f32[12,8], index: 13, kind: output, shape index: {}]
  %s14 = sld [smem:[#allocation0]]
  $region62: #{tpu_custom_call.1} parent=0
    _
  %s16 = ssub.s32 1, %s14
  %s17 = scalar_select 0, %s16, %s14
  // Predicated region
  $region2: #{tpu_custom_call.1} parent=0 // pred_check
    _
  $region3: #{tpu_custom_call.1} parent=0 // pred_check_branch
    %19 = sbr.rel (0) target = $region5
  $region4: #{tpu_custom_call.1} parent=0 // pred_region
    _
  $region5: #{tpu_custom_call.1} parent=0 // pred_fallthru
    _
  // Predicated region
  $region6: #{tpu_custom_call.1} parent=0 // pred_check
    _
  $region7: #{tpu_custom_call.1} parent=0 // pred_check_branch
    %21 = sbr.rel (0) target = $region9
  $region8: #{tpu_custom_call.1} parent=0 // pred_region
    _
  $region9: #{tpu_custom_call.1} parent=0 // pred_fallthru
    _
  // Predicated region
  $region10: #{tpu_custom_call.1} parent=0 // pred_check
    _
  $region11: #{tpu_custom_call.1} parent=0 // pred_check_branch
    %23 = sbr.rel (0) target = $region13
  $region12: #{tpu_custom_call.1} parent=0 // pred_region
    _
  $region13: #{tpu_custom_call.1} parent=0 // pred_fallthru
    _
  // Predicated region
  $region14: #{tpu_custom_call.1} parent=0 // pred_check
    _
  $region15: #{tpu_custom_call.1} parent=0 // pred_check_branch
    %25 = sbr.rel (0) target = $region17
  $region16: #{tpu_custom_call.1} parent=0 // pred_region
    _
  $region17: #{tpu_custom_call.1} parent=0 // pred_fallthru
    _
  // Predicated region
  $region18: #{tpu_custom_call.1} parent=0 // pred_check
    _
  $region19: #{tpu_custom_call.1} parent=0 // pred_check_branch
    %27 = sbr.rel (0) target = $region21
  $region20: #{tpu_custom_call.1} parent=0 // pred_region
    _
  $region21: #{tpu_custom_call.1} parent=0 // pred_fallthru
    _
  // Predicated region
  $region22: #{tpu_custom_call.1} parent=0 // pred_check
    _
  $region23: #{tpu_custom_call.1} parent=0 // pred_check_branch
    %29 = sbr.rel (0) target = $region25
  $region24: #{tpu_custom_call.1} parent=0 // pred_region
    _
  $region25: #{tpu_custom_call.1} parent=0 // pred_fallthru
    _
  // Predicated region
  $region26: #{tpu_custom_call.1} parent=0 // pred_check
    _
  $region27: #{tpu_custom_call.1} parent=0 // pred_check_branch
    %31 = sbr.rel (0) target = $region29
  $region28: #{tpu_custom_call.1} parent=0 // pred_region
    _
  $region29: #{tpu_custom_call.1} parent=0 // pred_fallthru
    _
  // Predicated region
  $region30: #{tpu_custom_call.1} parent=0 // pred_check
    _
  $region31: #{tpu_custom_call.1} parent=0 // pred_check_branch
    %33 = sbr.rel (0) target = $region33
  $region32: #{tpu_custom_call.1} parent=0 // pred_region
    _
  $region33: #{tpu_custom_call.1} parent=0 // pred_fallthru
    _
  // Predicated region
  $region34: #{tpu_custom_call.1} parent=0 // pred_check
    _
  $region35: #{tpu_custom_call.1} parent=0 // pred_check_branch
    %35 = sbr.rel (0) target = $region37
  $region36: #{tpu_custom_call.1} parent=0 // pred_region
    _
  $region37: #{tpu_custom_call.1} parent=0 // pred_fallthru
    _
  // Predicated region
  $region38: #{tpu_custom_call.1} parent=0 // pred_check
    _
  $region39: #{tpu_custom_call.1} parent=0 // pred_check_branch
    %37 = sbr.rel (0) target = $region41
  $region40: #{tpu_custom_call.1} parent=0 // pred_region
    _
  $region41: #{tpu_custom_call.1} parent=0 // pred_fallthru
    _
  // Predicated region
  $region42: #{tpu_custom_call.1} parent=0 // pred_check
    _
  $region43: #{tpu_custom_call.1} parent=0 // pred_check_branch
    %39 = sbr.rel (0) target = $region45
  $region44: #{tpu_custom_call.1} parent=0 // pred_region
    _
  $region45: #{tpu_custom_call.1} parent=0 // pred_fallthru
    _
  // Predicated region
  $region46: #{tpu_custom_call.1} parent=0 // pred_check
    _
  $region47: #{tpu_custom_call.1} parent=0 // pred_check_branch
    %41 = sbr.rel (0) target = $region49
  $region48: #{tpu_custom_call.1} parent=0 // pred_region
    _
  $region49: #{tpu_custom_call.1} parent=0 // pred_fallthru
    _
  // Predicated region
  $region50: #{tpu_custom_call.1} parent=0 // pred_check
    _
  $region51: #{tpu_custom_call.1} parent=0 // pred_check_branch
    %43 = sbr.rel (0) target = $region53
  $region52: #{tpu_custom_call.1} parent=0 // pred_region
    _
  $region53: #{tpu_custom_call.1} parent=0 // pred_fallthru
    _
  %v44 = vld [vmem:[%s0] sm:$0xff]
  %v45 = vld [vmem:[%s0 + $0x8] sm:$0xf]
  %v46 = vld [vmem:[%s1] sm:$0xff]
  %v47 = vld [vmem:[%s1 + $0x8] sm:$0xff]
  %v48 = vld [vmem:[%s1 + $0x10] sm:$0xff]
  %v49 = vld [vmem:[%s1 + $0x18] sm:$0x3f]
  %v50 = vld [vmem:[%s2] sm:$0xff]
  %v51 = vld [vmem:[%s2 + $0x8] sm:$0xff]
  %v52 = vld [vmem:[%s2 + $0x10] sm:$0xff]
  %v53 = vld [vmem:[%s2 + $0x18] sm:$0x3f]
  %55 = vset.pattern.permute.xlu0 0
  %56 = vperm.xlu0 %55, %v50
  %v57 = vpop.permute.xlu0 %56
  %60 = vset.pattern.permute.xlu0 0
  %61 = vperm.xlu0 %60, %v51
  %v62 = vpop.permute.xlu0 %61
  %65 = vset.pattern.permute.xlu0 0
  %66 = vperm.xlu0 %65, %v52
  %v67 = vpop.permute.xlu0 %66
  %70 = vset.pattern.permute.xlu0 0
  %71 = vperm.xlu0 %70, %v53
  %v72 = vpop.permute.xlu0 %71
  %vm74 = vcmask 97280
  %v76 = vsel %vm74, %v46, 0
  %v79 = vsel %vm74, %v47, 0
  %v82 = vsel %vm74, %v48, 0
  %v85 = vsel %vm74, %v49, 0
  %vm87 = vcmask 1043456
  %v89 = vsel %vm87, %v45, 0
  %91 = vmatpush.msra.mxu0 0.0
  %92 = vmatpush.msra.mxu0 0.0
  %93 = vmatpush.msra.mxu0 0.0
  %94 = vmatpush.msra.mxu0 0.0
  %95 = vmatpush.msra.mxu0 0.0
  %96 = vmatpush.msra.mxu0 0.0
  %97 = vmatpush.msra.mxu0 0.0
  %98 = vmatpush.msra.mxu0 0.0
  %99 = vmatpush.msra.mxu0 0.0
  %100 = vmatpush.msra.mxu0 0.0
  %101 = vmatpush.msra.mxu0 0.0
  %102 = vmatpush.msra.mxu0 0.0
  %103 = vmatpush.msra.mxu0 0.0
  %104 = vmatpush.msra.mxu0 0.0
  %105 = vmatpush.msra.mxu0 %v89
  %106 = vmatpush.msra.mxu0 %v44
  %107 = vmatmul.f32.gmra.mxu0 %v76
  %v108 = vpop.f32.mrf.mxu0
  %v109 = vadd.f32 %v57, %v108
  %110 = vmatmul.f32.gmra.mxu0 %v79
  %v111 = vpop.f32.mrf.mxu0
  %v112 = vadd.f32 %v62, %v111
  %113 = vmatmul.f32.gmra.mxu0 %v82
  %v114 = vpop.f32.mrf.mxu0
  %v115 = vadd.f32 %v67, %v114
  %116 = vmatmul.f32.gmra.mxu0 %v85
  %v117 = vpop.f32.mrf.mxu0
  %v118 = vadd.f32 %v72, %v117
  %119 = vdwg.mxu0
  %v120 = vmax.f32 %v109, 0.0
  %v121 = vmax.f32 %v112, 0.0
  %v122 = vmax.f32 %v115, 0.0
  %v123 = vmax.f32 %v118, 0.0
  %v124 = vld [vmem:[%s3] sm:$0x7]
  %v125 = vld [vmem:[%s4] sm:$0x7]
  %127 = vset.pattern.permute.xlu0 0
  %128 = vperm.xlu0 %127, %v125
  %v129 = vpop.permute.xlu0 %128
  %vm131 = vcmask 244736
  %v133 = vsel %vm131, %v124, 0
  %vm135 = vcmask 1045504
  %v137 = vsel %vm135, %v123, 0
  %139 = vmatpush.msra.mxu0 0.0
  %140 = vmatpush.msra.mxu0 0.0
  %141 = vmatpush.msra.mxu0 0.0
  %142 = vmatpush.msra.mxu0 0.0
  %143 = vmatpush.msra.mxu0 0.0
  %144 = vmatpush.msra.mxu0 0.0
  %145 = vmatpush.msra.mxu0 0.0
  %146 = vmatpush.msra.mxu0 0.0
  %147 = vmatpush.msra.mxu0 0.0
  %148 = vmatpush.msra.mxu0 0.0
  %149 = vmatpush.msra.mxu0 0.0
  %150 = vmatpush.msra.mxu0 0.0
  %151 = vmatpush.msra.mxu0 %v137
  %152 = vmatpush.msra.mxu0 %v122
  %153 = vmatpush.msra.mxu0 %v121
  %154 = vmatpush.msra.mxu0 %v120
  %155 = vmatmul.f32.gmra.mxu0 %v133
  %v156 = vpop.f32.mrf.mxu0
  %v157 = vadd.f32 %v129, %v156
  %158 = vdwg.mxu0
  %v159 = vld [vmem:[%s5] sm:$0xff]
  %v160 = vld [vmem:[%s5 + $0x8] sm:$0xff]
  %v161 = vld [vmem:[%s5 + $0x10] sm:$0xff]
  %v162 = vld [vmem:[%s5 + $0x18] sm:$0x3f]
  %164 = vset.pattern.permute.xlu0 0
  %165 = vperm.xlu0 %164, %v159
  %v166 = vpop.permute.xlu0 %165
  %169 = vset.pattern.permute.xlu0 0
  %170 = vperm.xlu0 %169, %v160
  %v171 = vpop.permute.xlu0 %170
  %174 = vset.pattern.permute.xlu0 0
  %175 = vperm.xlu0 %174, %v161
  %v176 = vpop.permute.xlu0 %175
  %179 = vset.pattern.permute.xlu0 0
  %180 = vperm.xlu0 %179, %v162
  %v181 = vpop.permute.xlu0 %180
  %183 = vset.pattern.permute.xlu0 1
  %184 = vperm.xlu0 %183, %v159
  %v185 = vpop.permute.xlu0 %184
  %187 = vset.pattern.permute.xlu0 1
  %188 = vperm.xlu0 %187, %v160
  %v189 = vpop.permute.xlu0 %188
  %191 = vset.pattern.permute.xlu0 1
  %192 = vperm.xlu0 %191, %v161
  %v193 = vpop.permute.xlu0 %192
  %195 = vset.pattern.permute.xlu0 1
  %196 = vperm.xlu0 %195, %v162
  %v197 = vpop.permute.xlu0 %196
  %199 = vset.pattern.permute.xlu0 2
  %200 = vperm.xlu0 %199, %v159
  %v201 = vpop.permute.xlu0 %200
  %203 = vset.pattern.permute.xlu0 2
  %204 = vperm.xlu0 %203, %v160
  %v205 = vpop.permute.xlu0 %204
  %207 = vset.pattern.permute.xlu0 2
  %208 = vperm.xlu0 %207, %v161
  %v209 = vpop.permute.xlu0 %208
  %211 = vset.pattern.permute.xlu0 2
  %212 = vperm.xlu0 %211, %v162
  %v213 = vpop.permute.xlu0 %212
  %v215 = vld [vmem:[%s6] sm:$0xff]
  %v216 = vld [vmem:[%s6 + $0x8] sm:$0xff]
  %v217 = vld [vmem:[%s6 + $0x10] sm:$0xff]
  %v218 = vld [vmem:[%s6 + $0x18] sm:$0x3f]
  %220 = vset.pattern.permute.xlu0 0
  %221 = vperm.xlu0 %220, %v215
  %v222 = vpop.permute.xlu0 %221
  %225 = vset.pattern.permute.xlu0 0
  %226 = vperm.xlu0 %225, %v216
  %v227 = vpop.permute.xlu0 %226
  %230 = vset.pattern.permute.xlu0 0
  %231 = vperm.xlu0 %230, %v217
  %v232 = vpop.permute.xlu0 %231
  %235 = vset.pattern.permute.xlu0 0
  %236 = vperm.xlu0 %235, %v218
  %v237 = vpop.permute.xlu0 %236
  %v239 = vld [vmem:[%s8] sm:$0x7]
  %241 = vset.pattern.permute.xlu0 0
  %242 = vperm.xlu0 %241, %v239
  %v243 = vpop.permute.xlu0 %242
  %v245 = vld [vmem:[%s7] sm:$0x7]
  %v246 = vmul.f32 %v157, %v157
  %v248 = vrot.slane %v246, 1
  %v250 = vadd.f32 %v246, %v248
  %vm251 = vcmp.gt.f32.partialorder %v250, 0.0
  %v252 = vsel %vm251, %v250, 1.0
  %v253 = vrsqrt.pop %v252
  %v254 = vmul.f32 %v253, %v252
  %v255 = vmul.f32 %v254, %v253
  %v256 = vmul.f32 0.5, %v255
  %v257 = vsub.f32 1.5, %v256
  %v258 = vmul.f32 %v253, %v257
  %vm259 = vweird.f32 %v252
  %vm260 = vweird.f32 %v253
  %vm261 = vmor %vm259, %vm260
  %v262 = vsel %vm261, %v253, %v258
  %v263 = vmul.f32 %v157, %v262
  %v264 = vsel %vm251, %v263, 1.0
  %v266 = vrot.slane %v262, 7
  %v268 = vmul.f32 %v157, %v266
  %v270 = vrot.slane %v268, 1
  %v272 = vsel %vm251, %v270, 0.0
  %v273 = vmul.f32 %v272, 0.1
  %v275 = vrot.slane %v273, 6
  %v277 = vsub.f32 %v157, %v275
  %v278 = vmul.f32 %v277, 0.1
  %v279 = vand.u32 2147483647, %v278
  %vm280 = vcmp.le.f32.partialorder %v279, 0.7853982
  %vm281 = vcmp.lt.s32.totalorder %v278, 0
  %v282 = vand.u32 %v278, 2139095040
  %v283 = vshrl.u32 %v282, 23
  %v284 = vsub.s32 %v283, 127
  %v285 = vand.u32 2147483647, %v278
  %v286 = vand.u32 %v285, 8388607
  %v287 = vor.u32 %v286, 8388608
  %v288 = vsub.s32 0, %v287
  %v289 = vadd.s32 %v284, 1
  %vm290 = vcmp.gt.s32.totalorder %v289, 0
  %v291 = vsel %vm290, %v289, 0
  %v292 = vshrl.u32 %v291, 5
  %v293 = vand.u32 %v291, 31
  %v294 = vsub.s32 32, %v293
  %v295 = vshrl.u32 683565275, %v294
  %v296 = vshll.u32 683565275, %v293
  %v297 = vshrl.u32 2475754826, %v294
  %v298 = vor.u32 %v296, %v297
  %v299 = vshll.u32 2475754826, %v293
  %v300 = vshrl.u32 2131351028, %v294
  %v301 = vor.u32 %v299, %v300
  %v302 = vshll.u32 2131351028, %v293
  %v303 = vshrl.u32 2102212464, %v294
  %v304 = vor.u32 %v302, %v303
  %v305 = vshll.u32 2102212464, %v293
  %v306 = vshrl.u32 920167782, %v294
  %v307 = vor.u32 %v305, %v306
  %v308 = vshll.u32 920167782, %v293
  %v309 = vshrl.u32 1326507024, %v294
  %v310 = vor.u32 %v308, %v309
  %vm311 = vcmp.lt.s32.totalorder %v292, 1
  %vm312 = vcmp.lt.s32.totalorder %v292, 2
  %vm313 = vcmp.lt.s32.totalorder %v292, 3
  %vm314 = vcmp.lt.s32.totalorder %v292, 4
  %v315 = vsel %vm311, %v295, %v298
  %v316 = vsel %vm314, %v304, 2102212464
  %v317 = vsel %vm313, %v301, %v316
  %v318 = vsel %vm312, %v315, %v317
  %v319 = vsel %vm311, %v298, %v301
  %v320 = vsel %vm314, %v307, 920167782
  %v321 = vsel %vm313, %v304, %v320
  %v322 = vsel %vm312, %v319, %v321
  %v323 = vsel %vm311, %v301, %v304
  %v324 = vsel %vm314, %v310, 1326507024
  %v325 = vsel %vm313, %v307, %v324
  %v326 = vsel %vm312, %v323, %v325
  %v327 = vshll.u32 %v287, 8
  %v328 = vand.u32 %v327, 65535
  %v329 = vshrl.u32 %v327, 16
  %v330 = vand.u32 %v326, 65535
  %v331 = vshrl.u32 %v326, 16
  %v332 = vmul.u32 %v328, %v330
  %v333 = vmul.u32 %v328, %v331
  %v334 = vmul.u32 %v329, %v330
  %v335 = vmul.u32 %v329, %v331
  %v336 = vshll.u32 %v333, 16
  %v337 = vshrl.u32 %v333, 16
  %v338 = vshll.u32 %v334, 16
  %v339 = vshrl.u32 %v334, 16
  %vm340 = vc.u32 %v332, %v336
  %v341 = vsel %vm340, 1, 0
  %v342 = vadd.s32 %v332, %v336
  %v343 = vadd.s32 %v335, %v341
  %vm344 = vc.u32 %v342, %v338
  %v345 = vsel %vm344, 1, 0
  %v346 = vadd.s32 %v342, %v338
  %v347 = vadd.s32 %v343, %v345
  %v348 = vadd.s32 %v347, %v337
  %v349 = vadd.s32 %v348, %v339
  %v350 = vand.u32 %v327, 65535
  %v351 = vshrl.u32 %v327, 16
  %v352 = vand.u32 %v322, 65535
  %v353 = vshrl.u32 %v322, 16
  %v354 = vmul.u32 %v350, %v352
  %v355 = vmul.u32 %v350, %v353
  %v356 = vmul.u32 %v351, %v352
  %v357 = vmul.u32 %v351, %v353
  %v358 = vshll.u32 %v355, 16
  %v359 = vshrl.u32 %v355, 16
  %v360 = vshll.u32 %v356, 16
  %v361 = vshrl.u32 %v356, 16
  %vm362 = vc.u32 %v354, %v358
  %v363 = vsel %vm362, 1, 0
  %v364 = vadd.s32 %v354, %v358
  %v365 = vadd.s32 %v357, %v363
  %vm366 = vc.u32 %v364, %v360
  %v367 = vsel %vm366, 1, 0
  %v368 = vadd.s32 %v364, %v360
  %v369 = vadd.s32 %v365, %v367
  %v370 = vadd.s32 %v369, %v359
  %v371 = vadd.s32 %v370, %v361
  %v372 = vmul.u32 %v327, %v318
  %v373 = vadd.s32 %v349, %v368
  %vm374 = vc.u32 %v349, %v368
  %v375 = vadd.s32 %v371, 1
  %v376 = vsel %vm374, %v375, %v371
  %v377 = vadd.s32 %v372, %v376
  %v378 = vadd.s32 %v377, 536870912
  %v379 = vshrl.u32 %v378, 30
  %v380 = vshll.u32 %v379, 30
  %v381 = vsub.s32 %v377, %v380
  %vm382 = vcmp.lt.s32.totalorder %v381, 0
  %v383 = vsub.s32 0, %v381
  %v384 = vsel %vm382, %v383, %v381
  %v385 = vclz %v384
  %v386 = vsub.s32 %v385, 2
  %vm387 = vcmp.gt.s32.totalorder 0, %v386
  %v388 = vsel %vm387, 0, %v386
  %v389 = vsub.s32 32, %v388
  %v390 = vshll.u32 %v381, %v388
  %v391 = vshrl.u32 %v373, %v389
  %v392 = vor.u32 %v390, %v391
  %v393 = vsub.s32 4294967266, %v388
  %v394 = vadd.s32 %v393, 127
  %v395 = vshll.u32 %v394, 23
  %v396 = vor.u32 4788187, %v395
  %v397 = vand.u32 2147483647, %v396
  %v399 = vcvt.s32.f32 %v392
  %v400 = vmul.f32 %v399, %v397
  %v401 = vxor.u32 %v400, 2147483648
  %v402 = vsel %vm281, %v401, %v400
  %v403 = vsub.s32 4, %v379
  %v404 = vsel %vm281, %v403, %v379
  %v405 = vsel %vm280, %v278, %v402
  %v406 = vsel %vm280, 0, %v404
  %v407 = vmul.f32 %v405, %v405
  %v408 = vmul.f32 %v407, -0.001358992
  %v409 = vadd.f32 %v408, 0.041655596
  %v410 = vmul.f32 %v407, %v409
  %v411 = vadd.f32 %v410, -0.4999988
  %v412 = vmul.f32 %v407, %v411
  %v413 = vadd.f32 1.0, %v412
  %v414 = vmul.f32 %v405, %v405
  %v415 = vmul.f32 %v414, -0.00019511016
  %v416 = vadd.f32 %v415, 0.008332121
  %v417 = vmul.f32 %v414, %v416
  %v418 = vadd.f32 %v417, -0.16666654
  %v419 = vmul.f32 %v414, %v418
  %v420 = vadd.f32 %v419, 1.0
  %v421 = vmul.f32 %v420, %v405
  %vm422 = vweird.f32 %v278
  %v423 = vand.u32 %v406, 3
  %vm424 = vcmp.lt.s32.totalorder %v423, 2
  %vm425 = vcmp.eq.s32.totalorder %v423, 0
  %v426 = vxor.u32 %v421, 2147483648
  %v427 = vsel %vm425, %v413, %v426
  %vm428 = vcmp.eq.s32.totalorder %v423, 2
  %v429 = vxor.u32 %v413, 2147483648
  %v430 = vsel %vm428, %v429, %v421
  %v431 = vsel %vm424, %v427, %v430
  %v432 = vsel %vm422, nan, %v431
  %v433 = vand.u32 2147483647, %v278
  %vm434 = vcmp.le.f32.partialorder %v433, 0.7853982
  %vm435 = vcmp.lt.s32.totalorder %v278, 0
  %v436 = vand.u32 %v278, 2139095040
  %v437 = vshrl.u32 %v436, 23
  %v438 = vsub.s32 %v437, 127
  %v439 = vand.u32 2147483647, %v278
  %v440 = vand.u32 %v439, 8388607
  %v441 = vor.u32 %v440, 8388608
  %v442 = vsub.s32 0, %v441
  %v443 = vadd.s32 %v438, 1
  %vm444 = vcmp.gt.s32.totalorder %v443, 0
  %v445 = vsel %vm444, %v443, 0
  %v446 = vshrl.u32 %v445, 5
  %v447 = vand.u32 %v445, 31
  %v448 = vsub.s32 32, %v447
  %v449 = vshrl.u32 683565275, %v448
  %v450 = vshll.u32 683565275, %v447
  %v451 = vshrl.u32 2475754826, %v448
  %v452 = vor.u32 %v450, %v451
  %v453 = vshll.u32 2475754826, %v447
  %v454 = vshrl.u32 2131351028, %v448
  %v455 = vor.u32 %v453, %v454
  %v456 = vshll.u32 2131351028, %v447
  %v457 = vshrl.u32 2102212464, %v448
  %v458 = vor.u32 %v456, %v457
  %v459 = vshll.u32 2102212464, %v447
  %v460 = vshrl.u32 920167782, %v448
  %v461 = vor.u32 %v459, %v460
  %v462 = vshll.u32 920167782, %v447
  %v463 = vshrl.u32 1326507024, %v448
  %v464 = vor.u32 %v462, %v463
  %vm465 = vcmp.lt.s32.totalorder %v446, 1
  %vm466 = vcmp.lt.s32.totalorder %v446, 2
  %vm467 = vcmp.lt.s32.totalorder %v446, 3
  %vm468 = vcmp.lt.s32.totalorder %v446, 4
  %v469 = vsel %vm465, %v449, %v452
  %v470 = vsel %vm468, %v458, 2102212464
  %v471 = vsel %vm467, %v455, %v470
  %v472 = vsel %vm466, %v469, %v471
  %v473 = vsel %vm465, %v452, %v455
  %v474 = vsel %vm468, %v461, 920167782
  %v475 = vsel %vm467, %v458, %v474
  %v476 = vsel %vm466, %v473, %v475
  %v477 = vsel %vm465, %v455, %v458
  %v478 = vsel %vm468, %v464, 1326507024
  %v479 = vsel %vm467, %v461, %v478
  %v480 = vsel %vm466, %v477, %v479
  %v481 = vshll.u32 %v441, 8
  %v482 = vand.u32 %v481, 65535
  %v483 = vshrl.u32 %v481, 16
  %v484 = vand.u32 %v480, 65535
  %v485 = vshrl.u32 %v480, 16
  %v486 = vmul.u32 %v482, %v484
  %v487 = vmul.u32 %v482, %v485
  %v488 = vmul.u32 %v483, %v484
  %v489 = vmul.u32 %v483, %v485
  %v490 = vshll.u32 %v487, 16
  %v491 = vshrl.u32 %v487, 16
  %v492 = vshll.u32 %v488, 16
  %v493 = vshrl.u32 %v488, 16
  %vm494 = vc.u32 %v486, %v490
  %v495 = vsel %vm494, 1, 0
  %v496 = vadd.s32 %v486, %v490
  %v497 = vadd.s32 %v489, %v495
  %vm498 = vc.u32 %v496, %v492
  %v499 = vsel %vm498, 1, 0
  %v500 = vadd.s32 %v496, %v492
  %v501 = vadd.s32 %v497, %v499
  %v502 = vadd.s32 %v501, %v491
  %v503 = vadd.s32 %v502, %v493
  %v504 = vand.u32 %v481, 65535
  %v505 = vshrl.u32 %v481, 16
  %v506 = vand.u32 %v476, 65535
  %v507 = vshrl.u32 %v476, 16
  %v508 = vmul.u32 %v504, %v506
  %v509 = vmul.u32 %v504, %v507
  %v510 = vmul.u32 %v505, %v506
  %v511 = vmul.u32 %v505, %v507
  %v512 = vshll.u32 %v509, 16
  %v513 = vshrl.u32 %v509, 16
  %v514 = vshll.u32 %v510, 16
  %v515 = vshrl.u32 %v510, 16
  %vm516 = vc.u32 %v508, %v512
  %v517 = vsel %vm516, 1, 0
  %v518 = vadd.s32 %v508, %v512
  %v519 = vadd.s32 %v511, %v517
  %vm520 = vc.u32 %v518, %v514
  %v521 = vsel %vm520, 1, 0
  %v522 = vadd.s32 %v518, %v514
  %v523 = vadd.s32 %v519, %v521
  %v524 = vadd.s32 %v523, %v513
  %v525 = vadd.s32 %v524, %v515
  %v526 = vmul.u32 %v481, %v472
  %v527 = vadd.s32 %v503, %v522
  %vm528 = vc.u32 %v503, %v522
  %v529 = vadd.s32 %v525, 1
  %v530 = vsel %vm528, %v529, %v525
  %v531 = vadd.s32 %v526, %v530
  %v532 = vadd.s32 %v531, 536870912
  %v533 = vshrl.u32 %v532, 30
  %v534 = vshll.u32 %v533, 30
  %v535 = vsub.s32 %v531, %v534
  %vm536 = vcmp.lt.s32.totalorder %v535, 0
  %v537 = vsub.s32 0, %v535
  %v538 = vsel %vm536, %v537, %v535
  %v539 = vclz %v538
  %v540 = vsub.s32 %v539, 2
  %vm541 = vcmp.gt.s32.totalorder 0, %v540
  %v542 = vsel %vm541, 0, %v540
  %v543 = vsub.s32 32, %v542
  %v544 = vshll.u32 %v535, %v542
  %v545 = vshrl.u32 %v527, %v543
  %v546 = vor.u32 %v544, %v545
  %v547 = vsub.s32 4294967266, %v542
  %v548 = vadd.s32 %v547, 127
  %v549 = vshll.u32 %v548, 23
  %v550 = vor.u32 4788187, %v549
  %v551 = vand.u32 2147483647, %v550
  %v553 = vcvt.s32.f32 %v546
  %v554 = vmul.f32 %v553, %v551
  %v555 = vxor.u32 %v554, 2147483648
  %v556 = vsel %vm435, %v555, %v554
  %v557 = vsub.s32 4, %v533
  %v558 = vsel %vm435, %v557, %v533
  %v559 = vsel %vm434, %v278, %v556
  %v560 = vsel %vm434, 0, %v558
  %v561 = vmul.f32 %v559, %v559
  %v562 = vmul.f32 %v561, -0.001358992
  %v563 = vadd.f32 %v562, 0.041655596
  %v564 = vmul.f32 %v561, %v563
  %v565 = vadd.f32 %v564, -0.4999988
  %v566 = vmul.f32 %v561, %v565
  %v567 = vadd.f32 1.0, %v566
  %v568 = vmul.f32 %v559, %v559
  %v569 = vmul.f32 %v568, -0.00019511016
  %v570 = vadd.f32 %v569, 0.008332121
  %v571 = vmul.f32 %v568, %v570
  %v572 = vadd.f32 %v571, -0.16666654
  %v573 = vmul.f32 %v568, %v572
  %v574 = vadd.f32 %v573, 1.0
  %v575 = vmul.f32 %v574, %v559
  %vm576 = vweird.f32 %v278
  %v577 = vadd.s32 %v560, 3
  %v578 = vand.u32 %v577, 3
  %vm579 = vcmp.lt.s32.totalorder %v578, 2
  %vm580 = vcmp.eq.s32.totalorder %v578, 0
  %v581 = vxor.u32 %v575, 2147483648
  %v582 = vsel %vm580, %v567, %v581
  %vm583 = vcmp.eq.s32.totalorder %v578, 2
  %v584 = vxor.u32 %v567, 2147483648
  %v585 = vsel %vm583, %v584, %v575
  %v586 = vsel %vm579, %v582, %v585
  %v587 = vsel %vm576, nan, %v586
  %v589 = vrot.slane %v432, 2
  %v591 = vmul.f32 %v264, %v589
  %v593 = vrot.slane %v587, 2
  %v595 = vmul.f32 %v272, %v593
  %v596 = vsub.f32 %v591, %v595
  %v597 = vmul.f32 %v272, %v589
  %v598 = vmul.f32 %v264, %v593
  %v599 = vadd.f32 %v597, %v598
  %v600 = vperm.slane %v596, 0
  %v601 = vmul.f32 %v600, %v166
  %v602 = vmul.f32 %v600, %v171
  %v603 = vmul.f32 %v600, %v176
  %v604 = vmul.f32 %v600, %v181
  %v605 = vperm.slane %v599, 0
  %v606 = vmul.f32 %v605, %v185
  %v607 = vmul.f32 %v605, %v189
  %v608 = vmul.f32 %v605, %v193
  %v609 = vmul.f32 %v605, %v197
  %v610 = vadd.f32 %v601, %v606
  %v611 = vadd.f32 %v602, %v607
  %v612 = vadd.f32 %v603, %v608
  %v613 = vadd.f32 %v604, %v609
  %v614 = vperm.slane %v277, 2
  %v615 = vmul.f32 %v614, %v201
  %v616 = vmul.f32 %v614, %v205
  %v617 = vmul.f32 %v614, %v209
  %v618 = vmul.f32 %v614, %v213
  %v619 = vadd.f32 %v610, %v615
  %v620 = vadd.f32 %v611, %v616
  %v621 = vadd.f32 %v612, %v617
  %v622 = vadd.f32 %v613, %v618
  %v623 = vadd.f32 %v619, %v222
  %v624 = vadd.f32 %v620, %v227
  %v625 = vadd.f32 %v621, %v232
  %v626 = vadd.f32 %v622, %v237
  %v627 = vmax.f32 %v623, 0.0
  %v628 = vmax.f32 %v624, 0.0
  %v629 = vmax.f32 %v625, 0.0
  %v630 = vmax.f32 %v626, 0.0
  %v632 = vsel %vm131, %v245, 0
  %v635 = vsel %vm135, %v630, 0
  %637 = vmatpush.msra.mxu0 0.0
  %638 = vmatpush.msra.mxu0 0.0
  %639 = vmatpush.msra.mxu0 0.0
  %640 = vmatpush.msra.mxu0 0.0
  %641 = vmatpush.msra.mxu0 0.0
  %642 = vmatpush.msra.mxu0 0.0
  %643 = vmatpush.msra.mxu0 0.0
  %644 = vmatpush.msra.mxu0 0.0
  %645 = vmatpush.msra.mxu0 0.0
  %646 = vmatpush.msra.mxu0 0.0
  %647 = vmatpush.msra.mxu0 0.0
  %648 = vmatpush.msra.mxu0 0.0
  %649 = vmatpush.msra.mxu0 %v635
  %650 = vmatpush.msra.mxu0 %v629
  %651 = vmatpush.msra.mxu0 %v628
  %652 = vmatpush.msra.mxu0 %v627
  %653 = vmatmul.f32.gmra.mxu0 %v632
  %v654 = vpop.f32.mrf.mxu0
  %v655 = vadd.f32 %v243, %v654
  %656 = vdwg.mxu0
  %v657 = vadd.f32 %v596, %v655
  %v659 = vrot.slane %v655, 1
  %v661 = vadd.f32 %v599, %v659
  %v662 = vadd.f32 %v277, %v655
  %v663 = vmul.f32 %v657, %v657
  %v664 = vmul.f32 %v661, %v661
  %v665 = vadd.f32 %v663, %v664
  %vm666 = vcmp.gt.f32.partialorder %v665, 0.0
  %v667 = vsel %vm666, %v665, 1.0
  %v668 = vrsqrt.pop %v667
  %v669 = vmul.f32 %v668, %v667
  %v670 = vmul.f32 %v669, %v668
  %v671 = vmul.f32 0.5, %v670
  %v672 = vsub.f32 1.5, %v671
  %v673 = vmul.f32 %v668, %v672
  %vm674 = vweird.f32 %v667
  %vm675 = vweird.f32 %v668
  %vm676 = vmor %vm674, %vm675
  %v677 = vsel %vm676, %v668, %v673
  %v678 = vmul.f32 %v657, %v677
  %v679 = vsel %vm666, %v678, 1.0
  %v680 = vmul.f32 %v661, %v677
  %v681 = vsel %vm666, %v680, 0.0
  %v682 = vmul.f32 %v681, 0.1
  %v684 = vrot.slane %v682, 6
  %v686 = vsub.f32 %v662, %v684
  %v687 = vmul.f32 %v686, 0.1
  %v688 = vand.u32 2147483647, %v687
  %vm689 = vcmp.le.f32.partialorder %v688, 0.7853982
  %vm690 = vcmp.lt.s32.totalorder %v687, 0
  %v691 = vand.u32 %v687, 2139095040
  %v692 = vshrl.u32 %v691, 23
  %v693 = vsub.s32 %v692, 127
  %v694 = vand.u32 2147483647, %v687
  %v695 = vand.u32 %v694, 8388607
  %v696 = vor.u32 %v695, 8388608
  %v697 = vsub.s32 0, %v696
  %v698 = vadd.s32 %v693, 1
  %vm699 = vcmp.gt.s32.totalorder %v698, 0
  %v700 = vsel %vm699, %v698, 0
  %v701 = vshrl.u32 %v700, 5
  %v702 = vand.u32 %v700, 31
  %v703 = vsub.s32 32, %v702
  %v704 = vshrl.u32 683565275, %v703
  %v705 = vshll.u32 683565275, %v702
  %v706 = vshrl.u32 2475754826, %v703
  %v707 = vor.u32 %v705, %v706
  %v708 = vshll.u32 2475754826, %v702
  %v709 = vshrl.u32 2131351028, %v703
  %v710 = vor.u32 %v708, %v709
  %v711 = vshll.u32 2131351028, %v702
  %v712 = vshrl.u32 2102212464, %v703
  %v713 = vor.u32 %v711, %v712
  %v714 = vshll.u32 2102212464, %v702
  %v715 = vshrl.u32 920167782, %v703
  %v716 = vor.u32 %v714, %v715
  %v717 = vshll.u32 920167782, %v702
  %v718 = vshrl.u32 1326507024, %v703
  %v719 = vor.u32 %v717, %v718
  %vm720 = vcmp.lt.s32.totalorder %v701, 1
  %vm721 = vcmp.lt.s32.totalorder %v701, 2
  %vm722 = vcmp.lt.s32.totalorder %v701, 3
  %vm723 = vcmp.lt.s32.totalorder %v701, 4
  %v724 = vsel %vm720, %v704, %v707
  %v725 = vsel %vm723, %v713, 2102212464
  %v726 = vsel %vm722, %v710, %v725
  %v727 = vsel %vm721, %v724, %v726
  %v728 = vsel %vm720, %v707, %v710
  %v729 = vsel %vm723, %v716, 920167782
  %v730 = vsel %vm722, %v713, %v729
  %v731 = vsel %vm721, %v728, %v730
  %v732 = vsel %vm720, %v710, %v713
  %v733 = vsel %vm723, %v719, 1326507024
  %v734 = vsel %vm722, %v716, %v733
  %v735 = vsel %vm721, %v732, %v734
  %v736 = vshll.u32 %v696, 8
  %v737 = vand.u32 %v736, 65535
  %v738 = vshrl.u32 %v736, 16
  %v739 = vand.u32 %v735, 65535
  %v740 = vshrl.u32 %v735, 16
  %v741 = vmul.u32 %v737, %v739
  %v742 = vmul.u32 %v737, %v740
  %v743 = vmul.u32 %v738, %v739
  %v744 = vmul.u32 %v738, %v740
  %v745 = vshll.u32 %v742, 16
  %v746 = vshrl.u32 %v742, 16
  %v747 = vshll.u32 %v743, 16
  %v748 = vshrl.u32 %v743, 16
  %vm749 = vc.u32 %v741, %v745
  %v750 = vsel %vm749, 1, 0
  %v751 = vadd.s32 %v741, %v745
  %v752 = vadd.s32 %v744, %v750
  %vm753 = vc.u32 %v751, %v747
  %v754 = vsel %vm753, 1, 0
  %v755 = vadd.s32 %v751, %v747
  %v756 = vadd.s32 %v752, %v754
  %v757 = vadd.s32 %v756, %v746
  %v758 = vadd.s32 %v757, %v748
  %v759 = vand.u32 %v736, 65535
  %v760 = vshrl.u32 %v736, 16
  %v761 = vand.u32 %v731, 65535
  %v762 = vshrl.u32 %v731, 16
  %v763 = vmul.u32 %v759, %v761
  %v764 = vmul.u32 %v759, %v762
  %v765 = vmul.u32 %v760, %v761
  %v766 = vmul.u32 %v760, %v762
  %v767 = vshll.u32 %v764, 16
  %v768 = vshrl.u32 %v764, 16
  %v769 = vshll.u32 %v765, 16
  %v770 = vshrl.u32 %v765, 16
  %vm771 = vc.u32 %v763, %v767
  %v772 = vsel %vm771, 1, 0
  %v773 = vadd.s32 %v763, %v767
  %v774 = vadd.s32 %v766, %v772
  %vm775 = vc.u32 %v773, %v769
  %v776 = vsel %vm775, 1, 0
  %v777 = vadd.s32 %v773, %v769
  %v778 = vadd.s32 %v774, %v776
  %v779 = vadd.s32 %v778, %v768
  %v780 = vadd.s32 %v779, %v770
  %v781 = vmul.u32 %v736, %v727
  %v782 = vadd.s32 %v758, %v777
  %vm783 = vc.u32 %v758, %v777
  %v784 = vadd.s32 %v780, 1
  %v785 = vsel %vm783, %v784, %v780
  %v786 = vadd.s32 %v781, %v785
  %v787 = vadd.s32 %v786, 536870912
  %v788 = vshrl.u32 %v787, 30
  %v789 = vshll.u32 %v788, 30
  %v790 = vsub.s32 %v786, %v789
  %vm791 = vcmp.lt.s32.totalorder %v790, 0
  %v792 = vsub.s32 0, %v790
  %v793 = vsel %vm791, %v792, %v790
  %v794 = vclz %v793
  %v795 = vsub.s32 %v794, 2
  %vm796 = vcmp.gt.s32.totalorder 0, %v795
  %v797 = vsel %vm796, 0, %v795
  %v798 = vsub.s32 32, %v797
  %v799 = vshll.u32 %v790, %v797
  %v800 = vshrl.u32 %v782, %v798
  %v801 = vor.u32 %v799, %v800
  %v802 = vsub.s32 4294967266, %v797
  %v803 = vadd.s32 %v802, 127
  %v804 = vshll.u32 %v803, 23
  %v805 = vor.u32 4788187, %v804
  %v806 = vand.u32 2147483647, %v805
  %v808 = vcvt.s32.f32 %v801
  %v809 = vmul.f32 %v808, %v806
  %v810 = vxor.u32 %v809, 2147483648
  %v811 = vsel %vm690, %v810, %v809
  %v812 = vsub.s32 4, %v788
  %v813 = vsel %vm690, %v812, %v788
  %v814 = vsel %vm689, %v687, %v811
  %v815 = vsel %vm689, 0, %v813
  %v816 = vmul.f32 %v814, %v814
  %v817 = vmul.f32 %v816, -0.001358992
  %v818 = vadd.f32 %v817, 0.041655596
  %v819 = vmul.f32 %v816, %v818
  %v820 = vadd.f32 %v819, -0.4999988
  %v821 = vmul.f32 %v816, %v820
  %v822 = vadd.f32 1.0, %v821
  %v823 = vmul.f32 %v814, %v814
  %v824 = vmul.f32 %v823, -0.00019511016
  %v825 = vadd.f32 %v824, 0.008332121
  %v826 = vmul.f32 %v823, %v825
  %v827 = vadd.f32 %v826, -0.16666654
  %v828 = vmul.f32 %v823, %v827
  %v829 = vadd.f32 %v828, 1.0
  %v830 = vmul.f32 %v829, %v814
  %vm831 = vweird.f32 %v687
  %v832 = vand.u32 %v815, 3
  %vm833 = vcmp.lt.s32.totalorder %v832, 2
  %vm834 = vcmp.eq.s32.totalorder %v832, 0
  %v835 = vxor.u32 %v830, 2147483648
  %v836 = vsel %vm834, %v822, %v835
  %vm837 = vcmp.eq.s32.totalorder %v832, 2
  %v838 = vxor.u32 %v822, 2147483648
  %v839 = vsel %vm837, %v838, %v830
  %v840 = vsel %vm833, %v836, %v839
  %v841 = vsel %vm831, nan, %v840
  %v842 = vand.u32 2147483647, %v687
  %vm843 = vcmp.le.f32.partialorder %v842, 0.7853982
  %vm844 = vcmp.lt.s32.totalorder %v687, 0
  %v845 = vand.u32 %v687, 2139095040
  %v846 = vshrl.u32 %v845, 23
  %v847 = vsub.s32 %v846, 127
  %v848 = vand.u32 2147483647, %v687
  %v849 = vand.u32 %v848, 8388607
  %v850 = vor.u32 %v849, 8388608
  %v851 = vsub.s32 0, %v850
  %v852 = vadd.s32 %v847, 1
  %vm853 = vcmp.gt.s32.totalorder %v852, 0
  %v854 = vsel %vm853, %v852, 0
  %v855 = vshrl.u32 %v854, 5
  %v856 = vand.u32 %v854, 31
  %v857 = vsub.s32 32, %v856
  %v858 = vshrl.u32 683565275, %v857
  %v859 = vshll.u32 683565275, %v856
  %v860 = vshrl.u32 2475754826, %v857
  %v861 = vor.u32 %v859, %v860
  %v862 = vshll.u32 2475754826, %v856
  %v863 = vshrl.u32 2131351028, %v857
  %v864 = vor.u32 %v862, %v863
  %v865 = vshll.u32 2131351028, %v856
  %v866 = vshrl.u32 2102212464, %v857
  %v867 = vor.u32 %v865, %v866
  %v868 = vshll.u32 2102212464, %v856
  %v869 = vshrl.u32 920167782, %v857
  %v870 = vor.u32 %v868, %v869
  %v871 = vshll.u32 920167782, %v856
  %v872 = vshrl.u32 1326507024, %v857
  %v873 = vor.u32 %v871, %v872
  %vm874 = vcmp.lt.s32.totalorder %v855, 1
  %vm875 = vcmp.lt.s32.totalorder %v855, 2
  %vm876 = vcmp.lt.s32.totalorder %v855, 3
  %vm877 = vcmp.lt.s32.totalorder %v855, 4
  %v878 = vsel %vm874, %v858, %v861
  %v879 = vsel %vm877, %v867, 2102212464
  %v880 = vsel %vm876, %v864, %v879
  %v881 = vsel %vm875, %v878, %v880
  %v882 = vsel %vm874, %v861, %v864
  %v883 = vsel %vm877, %v870, 920167782
  %v884 = vsel %vm876, %v867, %v883
  %v885 = vsel %vm875, %v882, %v884
  %v886 = vsel %vm874, %v864, %v867
  %v887 = vsel %vm877, %v873, 1326507024
  %v888 = vsel %vm876, %v870, %v887
  %v889 = vsel %vm875, %v886, %v888
  %v890 = vshll.u32 %v850, 8
  %v891 = vand.u32 %v890, 65535
  %v892 = vshrl.u32 %v890, 16
  %v893 = vand.u32 %v889, 65535
  %v894 = vshrl.u32 %v889, 16
  %v895 = vmul.u32 %v891, %v893
  %v896 = vmul.u32 %v891, %v894
  %v897 = vmul.u32 %v892, %v893
  %v898 = vmul.u32 %v892, %v894
  %v899 = vshll.u32 %v896, 16
  %v900 = vshrl.u32 %v896, 16
  %v901 = vshll.u32 %v897, 16
  %v902 = vshrl.u32 %v897, 16
  %vm903 = vc.u32 %v895, %v899
  %v904 = vsel %vm903, 1, 0
  %v905 = vadd.s32 %v895, %v899
  %v906 = vadd.s32 %v898, %v904
  %vm907 = vc.u32 %v905, %v901
  %v908 = vsel %vm907, 1, 0
  %v909 = vadd.s32 %v905, %v901
  %v910 = vadd.s32 %v906, %v908
  %v911 = vadd.s32 %v910, %v900
  %v912 = vadd.s32 %v911, %v902
  %v913 = vand.u32 %v890, 65535
  %v914 = vshrl.u32 %v890, 16
  %v915 = vand.u32 %v885, 65535
  %v916 = vshrl.u32 %v885, 16
  %v917 = vmul.u32 %v913, %v915
  %v918 = vmul.u32 %v913, %v916
  %v919 = vmul.u32 %v914, %v915
  %v920 = vmul.u32 %v914, %v916
  %v921 = vshll.u32 %v918, 16
  %v922 = vshrl.u32 %v918, 16
  %v923 = vshll.u32 %v919, 16
  %v924 = vshrl.u32 %v919, 16
  %vm925 = vc.u32 %v917, %v921
  %v926 = vsel %vm925, 1, 0
  %v927 = vadd.s32 %v917, %v921
  %v928 = vadd.s32 %v920, %v926
  %vm929 = vc.u32 %v927, %v923
  %v930 = vsel %vm929, 1, 0
  %v931 = vadd.s32 %v927, %v923
  %v932 = vadd.s32 %v928, %v930
  %v933 = vadd.s32 %v932, %v922
  %v934 = vadd.s32 %v933, %v924
  %v935 = vmul.u32 %v890, %v881
  %v936 = vadd.s32 %v912, %v931
  %vm937 = vc.u32 %v912, %v931
  %v938 = vadd.s32 %v934, 1
  %v939 = vsel %vm937, %v938, %v934
  %v940 = vadd.s32 %v935, %v939
  %v941 = vadd.s32 %v940, 536870912
  %v942 = vshrl.u32 %v941, 30
  %v943 = vshll.u32 %v942, 30
  %v944 = vsub.s32 %v940, %v943
  %vm945 = vcmp.lt.s32.totalorder %v944, 0
  %v946 = vsub.s32 0, %v944
  %v947 = vsel %vm945, %v946, %v944
  %v948 = vclz %v947
  %v949 = vsub.s32 %v948, 2
  %vm950 = vcmp.gt.s32.totalorder 0, %v949
  %v951 = vsel %vm950, 0, %v949
  %v952 = vsub.s32 32, %v951
  %v953 = vshll.u32 %v944, %v951
  %v954 = vshrl.u32 %v936, %v952
  %v955 = vor.u32 %v953, %v954
  %v956 = vsub.s32 4294967266, %v951
  %v957 = vadd.s32 %v956, 127
  %v958 = vshll.u32 %v957, 23
  %v959 = vor.u32 4788187, %v958
  %v960 = vand.u32 2147483647, %v959
  %v962 = vcvt.s32.f32 %v955
  %v963 = vmul.f32 %v962, %v960
  %v964 = vxor.u32 %v963, 2147483648
  %v965 = vsel %vm844, %v964, %v963
  %v966 = vsub.s32 4, %v942
  %v967 = vsel %vm844, %v966, %v942
  %v968 = vsel %vm843, %v687, %v965
  %v969 = vsel %vm843, 0, %v967
  %v970 = vmul.f32 %v968, %v968
  %v971 = vmul.f32 %v970, -0.001358992
  %v972 = vadd.f32 %v971, 0.041655596
  %v973 = vmul.f32 %v970, %v972
  %v974 = vadd.f32 %v973, -0.4999988
  %v975 = vmul.f32 %v970, %v974
  %v976 = vadd.f32 1.0, %v975
  %v977 = vmul.f32 %v968, %v968
  %v978 = vmul.f32 %v977, -0.00019511016
  %v979 = vadd.f32 %v978, 0.008332121
  %v980 = vmul.f32 %v977, %v979
  %v981 = vadd.f32 %v980, -0.16666654
  %v982 = vmul.f32 %v977, %v981
  %v983 = vadd.f32 %v982, 1.0
  %v984 = vmul.f32 %v983, %v968
  %vm985 = vweird.f32 %v687
  %v986 = vadd.s32 %v969, 3
  %v987 = vand.u32 %v986, 3
  %vm988 = vcmp.lt.s32.totalorder %v987, 2
  %vm989 = vcmp.eq.s32.totalorder %v987, 0
  %v990 = vxor.u32 %v984, 2147483648
  %v991 = vsel %vm989, %v976, %v990
  %vm992 = vcmp.eq.s32.totalorder %v987, 2
  %v993 = vxor.u32 %v976, 2147483648
  %v994 = vsel %vm992, %v993, %v984
  %v995 = vsel %vm988, %v991, %v994
  %v996 = vsel %vm985, nan, %v995
  %v998 = vrot.slane %v841, 2
  %v1000 = vmul.f32 %v679, %v998
  %v1002 = vrot.slane %v996, 2
  %v1004 = vmul.f32 %v681, %v1002
  %v1005 = vsub.f32 %v1000, %v1004
  %v1006 = vmul.f32 %v681, %v998
  %v1007 = vmul.f32 %v679, %v1002
  %v1008 = vadd.f32 %v1006, %v1007
  %v1009 = vperm.slane %v1005, 0
  %v1010 = vmul.f32 %v1009, %v166
  %v1011 = vmul.f32 %v1009, %v171
  %v1012 = vmul.f32 %v1009, %v176
  %v1013 = vmul.f32 %v1009, %v181
  %v1014 = vperm.slane %v1008, 0
  %v1015 = vmul.f32 %v1014, %v185
  %v1016 = vmul.f32 %v1014, %v189
  %v1017 = vmul.f32 %v1014, %v193
  %v1018 = vmul.f32 %v1014, %v197
  %v1019 = vadd.f32 %v1010, %v1015
  %v1020 = vadd.f32 %v1011, %v1016
  %v1021 = vadd.f32 %v1012, %v1017
  %v1022 = vadd.f32 %v1013, %v1018
  %v1023 = vperm.slane %v686, 2
  %v1024 = vmul.f32 %v1023, %v201
  %v1025 = vmul.f32 %v1023, %v205
  %v1026 = vmul.f32 %v1023, %v209
  %v1027 = vmul.f32 %v1023, %v213
  %v1028 = vadd.f32 %v1019, %v1024
  %v1029 = vadd.f32 %v1020, %v1025
  %v1030 = vadd.f32 %v1021, %v1026
  %v1031 = vadd.f32 %v1022, %v1027
  %v1032 = vadd.f32 %v1028, %v222
  %v1033 = vadd.f32 %v1029, %v227
  %v1034 = vadd.f32 %v1030, %v232
  %v1035 = vadd.f32 %v1031, %v237
  %v1036 = vmax.f32 %v1032, 0.0
  %v1037 = vmax.f32 %v1033, 0.0
  %v1038 = vmax.f32 %v1034, 0.0
  %v1039 = vmax.f32 %v1035, 0.0
  %v1041 = vsel %vm135, %v1039, 0
  %1043 = vmatpush.msra.mxu0 0.0
  %1044 = vmatpush.msra.mxu0 0.0
  %1045 = vmatpush.msra.mxu0 0.0
  %1046 = vmatpush.msra.mxu0 0.0
  %1047 = vmatpush.msra.mxu0 0.0
  %1048 = vmatpush.msra.mxu0 0.0
  %1049 = vmatpush.msra.mxu0 0.0
  %1050 = vmatpush.msra.mxu0 0.0
  %1051 = vmatpush.msra.mxu0 0.0
  %1052 = vmatpush.msra.mxu0 0.0
  %1053 = vmatpush.msra.mxu0 0.0
  %1054 = vmatpush.msra.mxu0 0.0
  %1055 = vmatpush.msra.mxu0 %v1041
  %1056 = vmatpush.msra.mxu0 %v1038
  %1057 = vmatpush.msra.mxu0 %v1037
  %1058 = vmatpush.msra.mxu0 %v1036
  %1059 = vmatmul.f32.gmra.mxu0 %v632
  %v1060 = vpop.f32.mrf.mxu0
  %v1061 = vadd.f32 %v243, %v1060
  %1062 = vdwg.mxu0
  %v1063 = vadd.f32 %v1005, %v1061
  %v1065 = vrot.slane %v1061, 1
  %v1067 = vadd.f32 %v1008, %v1065
  %v1068 = vadd.f32 %v686, %v1061
  %v1069 = vmul.f32 %v1063, %v1063
  %v1070 = vmul.f32 %v1067, %v1067
  %v1071 = vadd.f32 %v1069, %v1070
  %vm1072 = vcmp.gt.f32.partialorder %v1071, 0.0
  %v1073 = vsel %vm1072, %v1071, 1.0
  %v1074 = vrsqrt.pop %v1073
  %v1075 = vmul.f32 %v1074, %v1073
  %v1076 = vmul.f32 %v1075, %v1074
  %v1077 = vmul.f32 0.5, %v1076
  %v1078 = vsub.f32 1.5, %v1077
  %v1079 = vmul.f32 %v1074, %v1078
  %vm1080 = vweird.f32 %v1073
  %vm1081 = vweird.f32 %v1074
  %vm1082 = vmor %vm1080, %vm1081
  %v1083 = vsel %vm1082, %v1074, %v1079
  %v1084 = vmul.f32 %v1063, %v1083
  %v1085 = vsel %vm1072, %v1084, 1.0
  %v1086 = vmul.f32 %v1067, %v1083
  %v1087 = vsel %vm1072, %v1086, 0.0
  %v1088 = vmul.f32 %v1087, 0.1
  %v1090 = vrot.slane %v1088, 6
  %v1092 = vsub.f32 %v1068, %v1090
  %v1093 = vmul.f32 %v1092, 0.1
  %v1094 = vand.u32 2147483647, %v1093
  %vm1095 = vcmp.le.f32.partialorder %v1094, 0.7853982
  %vm1096 = vcmp.lt.s32.totalorder %v1093, 0
  %v1097 = vand.u32 %v1093, 2139095040
  %v1098 = vshrl.u32 %v1097, 23
  %v1099 = vsub.s32 %v1098, 127
  %v1100 = vand.u32 2147483647, %v1093
  %v1101 = vand.u32 %v1100, 8388607
  %v1102 = vor.u32 %v1101, 8388608
  %v1103 = vsub.s32 0, %v1102
  %v1104 = vadd.s32 %v1099, 1
  %vm1105 = vcmp.gt.s32.totalorder %v1104, 0
  %v1106 = vsel %vm1105, %v1104, 0
  %v1107 = vshrl.u32 %v1106, 5
  %v1108 = vand.u32 %v1106, 31
  %v1109 = vsub.s32 32, %v1108
  %v1110 = vshrl.u32 683565275, %v1109
  %v1111 = vshll.u32 683565275, %v1108
  %v1112 = vshrl.u32 2475754826, %v1109
  %v1113 = vor.u32 %v1111, %v1112
  %v1114 = vshll.u32 2475754826, %v1108
  %v1115 = vshrl.u32 2131351028, %v1109
  %v1116 = vor.u32 %v1114, %v1115
  %v1117 = vshll.u32 2131351028, %v1108
  %v1118 = vshrl.u32 2102212464, %v1109
  %v1119 = vor.u32 %v1117, %v1118
  %v1120 = vshll.u32 2102212464, %v1108
  %v1121 = vshrl.u32 920167782, %v1109
  %v1122 = vor.u32 %v1120, %v1121
  %v1123 = vshll.u32 920167782, %v1108
  %v1124 = vshrl.u32 1326507024, %v1109
  %v1125 = vor.u32 %v1123, %v1124
  %vm1126 = vcmp.lt.s32.totalorder %v1107, 1
  %vm1127 = vcmp.lt.s32.totalorder %v1107, 2
  %vm1128 = vcmp.lt.s32.totalorder %v1107, 3
  %vm1129 = vcmp.lt.s32.totalorder %v1107, 4
  %v1130 = vsel %vm1126, %v1110, %v1113
  %v1131 = vsel %vm1129, %v1119, 2102212464
  %v1132 = vsel %vm1128, %v1116, %v1131
  %v1133 = vsel %vm1127, %v1130, %v1132
  %v1134 = vsel %vm1126, %v1113, %v1116
  %v1135 = vsel %vm1129, %v1122, 920167782
  %v1136 = vsel %vm1128, %v1119, %v1135
  %v1137 = vsel %vm1127, %v1134, %v1136
  %v1138 = vsel %vm1126, %v1116, %v1119
  %v1139 = vsel %vm1129, %v1125, 1326507024
  %v1140 = vsel %vm1128, %v1122, %v1139
  %v1141 = vsel %vm1127, %v1138, %v1140
  %v1142 = vshll.u32 %v1102, 8
  %v1143 = vand.u32 %v1142, 65535
  %v1144 = vshrl.u32 %v1142, 16
  %v1145 = vand.u32 %v1141, 65535
  %v1146 = vshrl.u32 %v1141, 16
  %v1147 = vmul.u32 %v1143, %v1145
  %v1148 = vmul.u32 %v1143, %v1146
  %v1149 = vmul.u32 %v1144, %v1145
  %v1150 = vmul.u32 %v1144, %v1146
  %v1151 = vshll.u32 %v1148, 16
  %v1152 = vshrl.u32 %v1148, 16
  %v1153 = vshll.u32 %v1149, 16
  %v1154 = vshrl.u32 %v1149, 16
  %vm1155 = vc.u32 %v1147, %v1151
  %v1156 = vsel %vm1155, 1, 0
  %v1157 = vadd.s32 %v1147, %v1151
  %v1158 = vadd.s32 %v1150, %v1156
  %vm1159 = vc.u32 %v1157, %v1153
  %v1160 = vsel %vm1159, 1, 0
  %v1161 = vadd.s32 %v1157, %v1153
  %v1162 = vadd.s32 %v1158, %v1160
  %v1163 = vadd.s32 %v1162, %v1152
  %v1164 = vadd.s32 %v1163, %v1154
  %v1165 = vand.u32 %v1142, 65535
  %v1166 = vshrl.u32 %v1142, 16
  %v1167 = vand.u32 %v1137, 65535
  %v1168 = vshrl.u32 %v1137, 16
  %v1169 = vmul.u32 %v1165, %v1167
  %v1170 = vmul.u32 %v1165, %v1168
  %v1171 = vmul.u32 %v1166, %v1167
  %v1172 = vmul.u32 %v1166, %v1168
  %v1173 = vshll.u32 %v1170, 16
  %v1174 = vshrl.u32 %v1170, 16
  %v1175 = vshll.u32 %v1171, 16
  %v1176 = vshrl.u32 %v1171, 16
  %vm1177 = vc.u32 %v1169, %v1173
  %v1178 = vsel %vm1177, 1, 0
  %v1179 = vadd.s32 %v1169, %v1173
  %v1180 = vadd.s32 %v1172, %v1178
  %vm1181 = vc.u32 %v1179, %v1175
  %v1182 = vsel %vm1181, 1, 0
  %v1183 = vadd.s32 %v1179, %v1175
  %v1184 = vadd.s32 %v1180, %v1182
  %v1185 = vadd.s32 %v1184, %v1174
  %v1186 = vadd.s32 %v1185, %v1176
  %v1187 = vmul.u32 %v1142, %v1133
  %v1188 = vadd.s32 %v1164, %v1183
  %vm1189 = vc.u32 %v1164, %v1183
  %v1190 = vadd.s32 %v1186, 1
  %v1191 = vsel %vm1189, %v1190, %v1186
  %v1192 = vadd.s32 %v1187, %v1191
  %v1193 = vadd.s32 %v1192, 536870912
  %v1194 = vshrl.u32 %v1193, 30
  %v1195 = vshll.u32 %v1194, 30
  %v1196 = vsub.s32 %v1192, %v1195
  %vm1197 = vcmp.lt.s32.totalorder %v1196, 0
  %v1198 = vsub.s32 0, %v1196
  %v1199 = vsel %vm1197, %v1198, %v1196
  %v1200 = vclz %v1199
  %v1201 = vsub.s32 %v1200, 2
  %vm1202 = vcmp.gt.s32.totalorder 0, %v1201
  %v1203 = vsel %vm1202, 0, %v1201
  %v1204 = vsub.s32 32, %v1203
  %v1205 = vshll.u32 %v1196, %v1203
  %v1206 = vshrl.u32 %v1188, %v1204
  %v1207 = vor.u32 %v1205, %v1206
  %v1208 = vsub.s32 4294967266, %v1203
  %v1209 = vadd.s32 %v1208, 127
  %v1210 = vshll.u32 %v1209, 23
  %v1211 = vor.u32 4788187, %v1210
  %v1212 = vand.u32 2147483647, %v1211
  %v1214 = vcvt.s32.f32 %v1207
  %v1215 = vmul.f32 %v1214, %v1212
  %v1216 = vxor.u32 %v1215, 2147483648
  %v1217 = vsel %vm1096, %v1216, %v1215
  %v1218 = vsub.s32 4, %v1194
  %v1219 = vsel %vm1096, %v1218, %v1194
  %v1220 = vsel %vm1095, %v1093, %v1217
  %v1221 = vsel %vm1095, 0, %v1219
  %v1222 = vmul.f32 %v1220, %v1220
  %v1223 = vmul.f32 %v1222, -0.001358992
  %v1224 = vadd.f32 %v1223, 0.041655596
  %v1225 = vmul.f32 %v1222, %v1224
  %v1226 = vadd.f32 %v1225, -0.4999988
  %v1227 = vmul.f32 %v1222, %v1226
  %v1228 = vadd.f32 1.0, %v1227
  %v1229 = vmul.f32 %v1220, %v1220
  %v1230 = vmul.f32 %v1229, -0.00019511016
  %v1231 = vadd.f32 %v1230, 0.008332121
  %v1232 = vmul.f32 %v1229, %v1231
  %v1233 = vadd.f32 %v1232, -0.16666654
  %v1234 = vmul.f32 %v1229, %v1233
  %v1235 = vadd.f32 %v1234, 1.0
  %v1236 = vmul.f32 %v1235, %v1220
  %vm1237 = vweird.f32 %v1093
  %v1238 = vand.u32 %v1221, 3
  %vm1239 = vcmp.lt.s32.totalorder %v1238, 2
  %vm1240 = vcmp.eq.s32.totalorder %v1238, 0
  %v1241 = vxor.u32 %v1236, 2147483648
  %v1242 = vsel %vm1240, %v1228, %v1241
  %vm1243 = vcmp.eq.s32.totalorder %v1238, 2
  %v1244 = vxor.u32 %v1228, 2147483648
  %v1245 = vsel %vm1243, %v1244, %v1236
  %v1246 = vsel %vm1239, %v1242, %v1245
  %v1247 = vsel %vm1237, nan, %v1246
  %v1248 = vand.u32 2147483647, %v1093
  %vm1249 = vcmp.le.f32.partialorder %v1248, 0.7853982
  %vm1250 = vcmp.lt.s32.totalorder %v1093, 0
  %v1251 = vand.u32 %v1093, 2139095040
  %v1252 = vshrl.u32 %v1251, 23
  %v1253 = vsub.s32 %v1252, 127
  %v1254 = vand.u32 2147483647, %v1093
  %v1255 = vand.u32 %v1254, 8388607
  %v1256 = vor.u32 %v1255, 8388608
  %v1257 = vsub.s32 0, %v1256
  %v1258 = vadd.s32 %v1253, 1
  %vm1259 = vcmp.gt.s32.totalorder %v1258, 0
  %v1260 = vsel %vm1259, %v1258, 0
  %v1261 = vshrl.u32 %v1260, 5
  %v1262 = vand.u32 %v1260, 31
  %v1263 = vsub.s32 32, %v1262
  %v1264 = vshrl.u32 683565275, %v1263
  %v1265 = vshll.u32 683565275, %v1262
  %v1266 = vshrl.u32 2475754826, %v1263
  %v1267 = vor.u32 %v1265, %v1266
  %v1268 = vshll.u32 2475754826, %v1262
  %v1269 = vshrl.u32 2131351028, %v1263
  %v1270 = vor.u32 %v1268, %v1269
  %v1271 = vshll.u32 2131351028, %v1262
  %v1272 = vshrl.u32 2102212464, %v1263
  %v1273 = vor.u32 %v1271, %v1272
  %v1274 = vshll.u32 2102212464, %v1262
  %v1275 = vshrl.u32 920167782, %v1263
  %v1276 = vor.u32 %v1274, %v1275
  %v1277 = vshll.u32 920167782, %v1262
  %v1278 = vshrl.u32 1326507024, %v1263
  %v1279 = vor.u32 %v1277, %v1278
  %vm1280 = vcmp.lt.s32.totalorder %v1261, 1
  %vm1281 = vcmp.lt.s32.totalorder %v1261, 2
  %vm1282 = vcmp.lt.s32.totalorder %v1261, 3
  %vm1283 = vcmp.lt.s32.totalorder %v1261, 4
  %v1284 = vsel %vm1280, %v1264, %v1267
  %v1285 = vsel %vm1283, %v1273, 2102212464
  %v1286 = vsel %vm1282, %v1270, %v1285
  %v1287 = vsel %vm1281, %v1284, %v1286
  %v1288 = vsel %vm1280, %v1267, %v1270
  %v1289 = vsel %vm1283, %v1276, 920167782
  %v1290 = vsel %vm1282, %v1273, %v1289
  %v1291 = vsel %vm1281, %v1288, %v1290
  %v1292 = vsel %vm1280, %v1270, %v1273
  %v1293 = vsel %vm1283, %v1279, 1326507024
  %v1294 = vsel %vm1282, %v1276, %v1293
  %v1295 = vsel %vm1281, %v1292, %v1294
  %v1296 = vshll.u32 %v1256, 8
  %v1297 = vand.u32 %v1296, 65535
  %v1298 = vshrl.u32 %v1296, 16
  %v1299 = vand.u32 %v1295, 65535
  %v1300 = vshrl.u32 %v1295, 16
  %v1301 = vmul.u32 %v1297, %v1299
  %v1302 = vmul.u32 %v1297, %v1300
  %v1303 = vmul.u32 %v1298, %v1299
  %v1304 = vmul.u32 %v1298, %v1300
  %v1305 = vshll.u32 %v1302, 16
  %v1306 = vshrl.u32 %v1302, 16
  %v1307 = vshll.u32 %v1303, 16
  %v1308 = vshrl.u32 %v1303, 16
  %vm1309 = vc.u32 %v1301, %v1305
  %v1310 = vsel %vm1309, 1, 0
  %v1311 = vadd.s32 %v1301, %v1305
  %v1312 = vadd.s32 %v1304, %v1310
  %vm1313 = vc.u32 %v1311, %v1307
  %v1314 = vsel %vm1313, 1, 0
  %v1315 = vadd.s32 %v1311, %v1307
  %v1316 = vadd.s32 %v1312, %v1314
  %v1317 = vadd.s32 %v1316, %v1306
  %v1318 = vadd.s32 %v1317, %v1308
  %v1319 = vand.u32 %v1296, 65535
  %v1320 = vshrl.u32 %v1296, 16
  %v1321 = vand.u32 %v1291, 65535
  %v1322 = vshrl.u32 %v1291, 16
  %v1323 = vmul.u32 %v1319, %v1321
  %v1324 = vmul.u32 %v1319, %v1322
  %v1325 = vmul.u32 %v1320, %v1321
  %v1326 = vmul.u32 %v1320, %v1322
  %v1327 = vshll.u32 %v1324, 16
  %v1328 = vshrl.u32 %v1324, 16
  %v1329 = vshll.u32 %v1325, 16
  %v1330 = vshrl.u32 %v1325, 16
  %vm1331 = vc.u32 %v1323, %v1327
  %v1332 = vsel %vm1331, 1, 0
  %v1333 = vadd.s32 %v1323, %v1327
  %v1334 = vadd.s32 %v1326, %v1332
  %vm1335 = vc.u32 %v1333, %v1329
  %v1336 = vsel %vm1335, 1, 0
  %v1337 = vadd.s32 %v1333, %v1329
  %v1338 = vadd.s32 %v1334, %v1336
  %v1339 = vadd.s32 %v1338, %v1328
  %v1340 = vadd.s32 %v1339, %v1330
  %v1341 = vmul.u32 %v1296, %v1287
  %v1342 = vadd.s32 %v1318, %v1337
  %vm1343 = vc.u32 %v1318, %v1337
  %v1344 = vadd.s32 %v1340, 1
  %v1345 = vsel %vm1343, %v1344, %v1340
  %v1346 = vadd.s32 %v1341, %v1345
  %v1347 = vadd.s32 %v1346, 536870912
  %v1348 = vshrl.u32 %v1347, 30
  %v1349 = vshll.u32 %v1348, 30
  %v1350 = vsub.s32 %v1346, %v1349
  %vm1351 = vcmp.lt.s32.totalorder %v1350, 0
  %v1352 = vsub.s32 0, %v1350
  %v1353 = vsel %vm1351, %v1352, %v1350
  %v1354 = vclz %v1353
  %v1355 = vsub.s32 %v1354, 2
  %vm1356 = vcmp.gt.s32.totalorder 0, %v1355
  %v1357 = vsel %vm1356, 0, %v1355
  %v1358 = vsub.s32 32, %v1357
  %v1359 = vshll.u32 %v1350, %v1357
  %v1360 = vshrl.u32 %v1342, %v1358
  %v1361 = vor.u32 %v1359, %v1360
  %v1362 = vsub.s32 4294967266, %v1357
  %v1363 = vadd.s32 %v1362, 127
  %v1364 = vshll.u32 %v1363, 23
  %v1365 = vor.u32 4788187, %v1364
  %v1366 = vand.u32 2147483647, %v1365
  %v1368 = vcvt.s32.f32 %v1361
  %v1369 = vmul.f32 %v1368, %v1366
  %v1370 = vxor.u32 %v1369, 2147483648
  %v1371 = vsel %vm1250, %v1370, %v1369
  %v1372 = vsub.s32 4, %v1348
  %v1373 = vsel %vm1250, %v1372, %v1348
  %v1374 = vsel %vm1249, %v1093, %v1371
  %v1375 = vsel %vm1249, 0, %v1373
  %v1376 = vmul.f32 %v1374, %v1374
  %v1377 = vmul.f32 %v1376, -0.001358992
  %v1378 = vadd.f32 %v1377, 0.041655596
  %v1379 = vmul.f32 %v1376, %v1378
  %v1380 = vadd.f32 %v1379, -0.4999988
  %v1381 = vmul.f32 %v1376, %v1380
  %v1382 = vadd.f32 1.0, %v1381
  %v1383 = vmul.f32 %v1374, %v1374
  %v1384 = vmul.f32 %v1383, -0.00019511016
  %v1385 = vadd.f32 %v1384, 0.008332121
  %v1386 = vmul.f32 %v1383, %v1385
  %v1387 = vadd.f32 %v1386, -0.16666654
  %v1388 = vmul.f32 %v1383, %v1387
  %v1389 = vadd.f32 %v1388, 1.0
  %v1390 = vmul.f32 %v1389, %v1374
  %vm1391 = vweird.f32 %v1093
  %v1392 = vadd.s32 %v1375, 3
  %v1393 = vand.u32 %v1392, 3
  %vm1394 = vcmp.lt.s32.totalorder %v1393, 2
  %vm1395 = vcmp.eq.s32.totalorder %v1393, 0
  %v1396 = vxor.u32 %v1390, 2147483648
  %v1397 = vsel %vm1395, %v1382, %v1396
  %vm1398 = vcmp.eq.s32.totalorder %v1393, 2
  %v1399 = vxor.u32 %v1382, 2147483648
  %v1400 = vsel %vm1398, %v1399, %v1390
  %v1401 = vsel %vm1394, %v1397, %v1400
  %v1402 = vsel %vm1391, nan, %v1401
  %v1404 = vrot.slane %v1247, 2
  %v1406 = vmul.f32 %v1085, %v1404
  %v1408 = vrot.slane %v1402, 2
  %v1410 = vmul.f32 %v1087, %v1408
  %v1411 = vsub.f32 %v1406, %v1410
  %v1412 = vmul.f32 %v1087, %v1404
  %v1413 = vmul.f32 %v1085, %v1408
  %v1414 = vadd.f32 %v1412, %v1413
  %v1415 = vperm.slane %v1411, 0
  %v1416 = vmul.f32 %v1415, %v166
  %v1417 = vmul.f32 %v1415, %v171
  %v1418 = vmul.f32 %v1415, %v176
  %v1419 = vmul.f32 %v1415, %v181
  %v1420 = vperm.slane %v1414, 0
  %v1421 = vmul.f32 %v1420, %v185
  %v1422 = vmul.f32 %v1420, %v189
  %v1423 = vmul.f32 %v1420, %v193
  %v1424 = vmul.f32 %v1420, %v197
  %v1425 = vadd.f32 %v1416, %v1421
  %v1426 = vadd.f32 %v1417, %v1422
  %v1427 = vadd.f32 %v1418, %v1423
  %v1428 = vadd.f32 %v1419, %v1424
  %v1429 = vperm.slane %v1092, 2
  %v1430 = vmul.f32 %v1429, %v201
  %v1431 = vmul.f32 %v1429, %v205
  %v1432 = vmul.f32 %v1429, %v209
  %v1433 = vmul.f32 %v1429, %v213
  %v1434 = vadd.f32 %v1425, %v1430
  %v1435 = vadd.f32 %v1426, %v1431
  %v1436 = vadd.f32 %v1427, %v1432
  %v1437 = vadd.f32 %v1428, %v1433
  %v1438 = vadd.f32 %v1434, %v222
  %v1439 = vadd.f32 %v1435, %v227
  %v1440 = vadd.f32 %v1436, %v232
  %v1441 = vadd.f32 %v1437, %v237
  %v1442 = vmax.f32 %v1438, 0.0
  %v1443 = vmax.f32 %v1439, 0.0
  %v1444 = vmax.f32 %v1440, 0.0
  %v1445 = vmax.f32 %v1441, 0.0
  %v1447 = vsel %vm135, %v1445, 0
  %1449 = vmatpush.msra.mxu0 0.0
  %1450 = vmatpush.msra.mxu0 0.0
  %1451 = vmatpush.msra.mxu0 0.0
  %1452 = vmatpush.msra.mxu0 0.0
  %1453 = vmatpush.msra.mxu0 0.0
  %1454 = vmatpush.msra.mxu0 0.0
  %1455 = vmatpush.msra.mxu0 0.0
  %1456 = vmatpush.msra.mxu0 0.0
  %1457 = vmatpush.msra.mxu0 0.0
  %1458 = vmatpush.msra.mxu0 0.0
  %1459 = vmatpush.msra.mxu0 0.0
  %1460 = vmatpush.msra.mxu0 0.0
  %1461 = vmatpush.msra.mxu0 %v1447
  %1462 = vmatpush.msra.mxu0 %v1444
  %1463 = vmatpush.msra.mxu0 %v1443
  %1464 = vmatpush.msra.mxu0 %v1442
  %1465 = vmatmul.f32.gmra.mxu0 %v632
  %v1466 = vpop.f32.mrf.mxu0
  %v1467 = vadd.f32 %v243, %v1466
  %1468 = vdwg.mxu0
  %v1469 = vadd.f32 %v1411, %v1467
  %v1471 = vrot.slane %v1467, 1
  %v1473 = vadd.f32 %v1414, %v1471
  %v1474 = vadd.f32 %v1092, %v1467
  %v1475 = vld [vmem:[%s9] sm:$0xff]
  %v1476 = vld [vmem:[%s9 + $0x8] sm:$0xff]
  %v1477 = vld [vmem:[%s9 + $0x10] sm:$0xff]
  %v1478 = vld [vmem:[%s9 + $0x18] sm:$0x3f]
  %v1479 = vperm.slane %v1469, 0
  %1481 = vset.pattern.permute.xlu0 0
  %1482 = vperm.xlu0 %1481, %v1475
  %v1483 = vpop.permute.xlu0 %1482
  %1486 = vset.pattern.permute.xlu0 0
  %1487 = vperm.xlu0 %1486, %v1476
  %v1488 = vpop.permute.xlu0 %1487
  %1491 = vset.pattern.permute.xlu0 0
  %1492 = vperm.xlu0 %1491, %v1477
  %v1493 = vpop.permute.xlu0 %1492
  %1496 = vset.pattern.permute.xlu0 0
  %1497 = vperm.xlu0 %1496, %v1478
  %v1498 = vpop.permute.xlu0 %1497
  %v1500 = vmul.f32 %v1479, %v1483
  %v1501 = vmul.f32 %v1479, %v1488
  %v1502 = vmul.f32 %v1479, %v1493
  %v1503 = vmul.f32 %v1479, %v1498
  %v1504 = vperm.slane %v1473, 0
  %1505 = vset.pattern.permute.xlu0 1
  %1506 = vperm.xlu0 %1505, %v1475
  %v1507 = vpop.permute.xlu0 %1506
  %1509 = vset.pattern.permute.xlu0 1
  %1510 = vperm.xlu0 %1509, %v1476
  %v1511 = vpop.permute.xlu0 %1510
  %1513 = vset.pattern.permute.xlu0 1
  %1514 = vperm.xlu0 %1513, %v1477
  %v1515 = vpop.permute.xlu0 %1514
  %1517 = vset.pattern.permute.xlu0 1
  %1518 = vperm.xlu0 %1517, %v1478
  %v1519 = vpop.permute.xlu0 %1518
  %v1521 = vmul.f32 %v1504, %v1507
  %v1522 = vmul.f32 %v1504, %v1511
  %v1523 = vmul.f32 %v1504, %v1515
  %v1524 = vmul.f32 %v1504, %v1519
  %v1525 = vadd.f32 %v1500, %v1521
  %v1526 = vadd.f32 %v1501, %v1522
  %v1527 = vadd.f32 %v1502, %v1523
  %v1528 = vadd.f32 %v1503, %v1524
  %v1529 = vperm.slane %v1474, 2
  %1530 = vset.pattern.permute.xlu0 2
  %1531 = vperm.xlu0 %1530, %v1475
  %v1532 = vpop.permute.xlu0 %1531
  %1534 = vset.pattern.permute.xlu0 2
  %1535 = vperm.xlu0 %1534, %v1476
  %v1536 = vpop.permute.xlu0 %1535
  %1538 = vset.pattern.permute.xlu0 2
  %1539 = vperm.xlu0 %1538, %v1477
  %v1540 = vpop.permute.xlu0 %1539
  %1542 = vset.pattern.permute.xlu0 2
  %1543 = vperm.xlu0 %1542, %v1478
  %v1544 = vpop.permute.xlu0 %1543
  %v1546 = vmul.f32 %v1529, %v1532
  %v1547 = vmul.f32 %v1529, %v1536
  %v1548 = vmul.f32 %v1529, %v1540
  %v1549 = vmul.f32 %v1529, %v1544
  %v1550 = vadd.f32 %v1525, %v1546
  %v1551 = vadd.f32 %v1526, %v1547
  %v1552 = vadd.f32 %v1527, %v1548
  %v1553 = vadd.f32 %v1528, %v1549
  %v1554 = vld [vmem:[%s10] sm:$0xff]
  %v1555 = vld [vmem:[%s10 + $0x8] sm:$0xff]
  %v1556 = vld [vmem:[%s10 + $0x10] sm:$0xff]
  %v1557 = vld [vmem:[%s10 + $0x18] sm:$0x3f]
  %1559 = vset.pattern.permute.xlu0 0
  %1560 = vperm.xlu0 %1559, %v1554
  %v1561 = vpop.permute.xlu0 %1560
  %1564 = vset.pattern.permute.xlu0 0
  %1565 = vperm.xlu0 %1564, %v1555
  %v1566 = vpop.permute.xlu0 %1565
  %1569 = vset.pattern.permute.xlu0 0
  %1570 = vperm.xlu0 %1569, %v1556
  %v1571 = vpop.permute.xlu0 %1570
  %1574 = vset.pattern.permute.xlu0 0
  %1575 = vperm.xlu0 %1574, %v1557
  %v1576 = vpop.permute.xlu0 %1575
  %v1578 = vadd.f32 %v1550, %v1561
  %v1579 = vadd.f32 %v1551, %v1566
  %v1580 = vadd.f32 %v1552, %v1571
  %v1581 = vadd.f32 %v1553, %v1576
  %v1582 = vmax.f32 %v1578, 0.0
  %v1583 = vmax.f32 %v1579, 0.0
  %v1584 = vmax.f32 %v1580, 0.0
  %v1585 = vmax.f32 %v1581, 0.0
  %v1586 = vld [vmem:[%s11] sm:$0xff]
  %v1587 = vld [vmem:[%s11 + $0x8] sm:$0xf]
  %v1588 = vld [vmem:[%s12] sm:$0xff]
  %v1589 = vld [vmem:[%s12 + $0x8] sm:$0xf]
  %1591 = vset.pattern.permute.xlu0 0
  %1592 = vperm.xlu0 %1591, %v1588
  %v1593 = vpop.permute.xlu0 %1592
  %1596 = vset.pattern.permute.xlu0 0
  %1597 = vperm.xlu0 %1596, %v1589
  %v1598 = vpop.permute.xlu0 %1597
  %v1601 = vsel %vm131, %v1586, 0
  %v1604 = vsel %vm131, %v1587, 0
  %v1607 = vsel %vm135, %v1585, 0
  %1609 = vmatpush.msra.mxu0 0.0
  %1610 = vmatpush.msra.mxu0 0.0
  %1611 = vmatpush.msra.mxu0 0.0
  %1612 = vmatpush.msra.mxu0 0.0
  %1613 = vmatpush.msra.mxu0 0.0
  %1614 = vmatpush.msra.mxu0 0.0
  %1615 = vmatpush.msra.mxu0 0.0
  %1616 = vmatpush.msra.mxu0 0.0
  %1617 = vmatpush.msra.mxu0 0.0
  %1618 = vmatpush.msra.mxu0 0.0
  %1619 = vmatpush.msra.mxu0 0.0
  %1620 = vmatpush.msra.mxu0 0.0
  %1621 = vmatpush.msra.mxu0 %v1607
  %1622 = vmatpush.msra.mxu0 %v1584
  %1623 = vmatpush.msra.mxu0 %v1583
  %1624 = vmatpush.msra.mxu0 %v1582
  %1625 = vmatmul.f32.gmra.mxu0 %v1601
  %v1626 = vpop.f32.mrf.mxu0
  %v1627 = vadd.f32 %v1593, %v1626
  %1628 = vmatmul.f32.gmra.mxu0 %v1604
  %v1629 = vpop.f32.mrf.mxu0
  %v1630 = vadd.f32 %v1598, %v1629
  %1631 = vdwg.mxu0
  %vm1632 = vcmask 64512
  %1633 = vst.msk [vmem:[%s13] sm:$0xff] %vm1632, %v1627
  %vm1634 = vcmask 60416
  %1635 = vst.msk [vmem:[%s13 + $0x8] sm:$0xf] %vm1634, %v1630
  // Predicated region
  $region54: #{tpu_custom_call.1} parent=0 // pred_check
    _
  $region55: #{tpu_custom_call.1} parent=0 // pred_check_branch
    %1637 = sbr.rel (0) target = $region57
  $region56: #{tpu_custom_call.1} parent=0 // pred_region
    _
  $region57: #{tpu_custom_call.1} parent=0 // pred_fallthru
    _
  // Predicated region
  $region58: #{tpu_custom_call.1} parent=0 // pred_check
    _
  $region59: #{tpu_custom_call.1} parent=0 // pred_check_branch
    %1639 = sbr.rel (0) target = $region61
  $region60: #{tpu_custom_call.1} parent=0 // pred_region
    _
  $region61: #{tpu_custom_call.1} parent=0 // pred_fallthru
    _

</llo_original>
